<compile_context>
chip_gen: v5e
topology: v5e:2x2
jax: 0.10.0
libtpu: 0.0.40
codegen_flags: <defaults>
</compile_context>

<pallas_src>
import math

import jax
import jax.numpy as jnp
import numpy as np
from jax import lax
from jax.experimental import pallas as pl
from jax.experimental.pallas import tpu as pltpu

# ---------------- problem sizes (small, consistent with the module) ----------------
B = 2          # batch
SQ = 8         # query sequence length
SK = 8         # key/value sequence length
D = 32         # d_model
H = 4          # num_heads
DK = D // H    # d_k


def _mha_kernel(q_ref, k_ref, v_ref, bias_ref,
                wq_ref, wk_ref, wv_ref, wo_ref,
                bq_ref, bk_ref, bv_ref, bo_ref,
                o_ref):
    q = q_ref[0].astype(jnp.float32)     # (SQ, D)
    k = k_ref[0].astype(jnp.float32)     # (SK, D)
    v = v_ref[0].astype(jnp.float32)     # (SK, D)
    bias = bias_ref[0, 0]                # (SQ, SK) additive mask bias (0 or -1e9)

    # Projections. Weights are already (in, out); 1/sqrt(d_k) is folded into
    # wq/bq on the host, so no scale multiply and no transpose here.
    qp = jnp.dot(q, wq_ref[...], preferred_element_type=jnp.float32) + bq_ref[0]
    kp = jnp.dot(k, wk_ref[...], preferred_element_type=jnp.float32) + bk_ref[0]
    vp = jnp.dot(v, wv_ref[...], preferred_element_type=jnp.float32) + bv_ref[0]

    # split_heads: (S, D) -> (H, S, DK)
    qh = qp.reshape(SQ, H, DK).transpose(1, 0, 2)
    kh = kp.reshape(SK, H, DK).transpose(1, 0, 2)
    vh = vp.reshape(SK, H, DK).transpose(1, 0, 2)

    # scores[h] = qh[h] @ kh[h].T  (already scaled), one batched dot_general.
    scores = lax.dot_general(
        qh, kh,
        dimension_numbers=(((2,), (2,)), ((0,), (0,))),
        preferred_element_type=jnp.float32)              # (H, SQ, SK)
    scores = scores + bias[None, :, :]                   # additive mask
    probs = jax.nn.softmax(scores, axis=-1)

    # ctx[h] = probs[h] @ vh[h], one batched dot_general.
    ctx = lax.dot_general(
        probs, vh,
        dimension_numbers=(((2,), (1,)), ((0,), (0,))),
        preferred_element_type=jnp.float32)              # (H, SQ, DK)

    # combine_heads: (H, SQ, DK) -> (SQ, D), then output projection.
    merged = ctx.transpose(1, 0, 2).reshape(SQ, D)
    out = jnp.dot(merged, wo_ref[...],
                  preferred_element_type=jnp.float32) + bo_ref[0]
    o_ref[0] = out.astype(o_ref.dtype)


def multi_head_attention_pallas(q, k, v, mask, params):
    """q,k,v: (B, S, D); mask: (B, 1, SQ, SK) with 0 = masked (or None).

    params = (Wq, bq, Wk, bk, Wv, bv, Wo, bo) in PyTorch nn.Linear layout:
    W is (out, in), b is (out,).
    """
    Wq, bq, Wk, bk, Wv, bv, Wo, bo = params

    # ---- host-side parameter prep (one-time transform, not per-token work) ----
    scale = 1.0 / math.sqrt(DK)
    wq_t = (Wq * scale).T          # (D, D), scale folded into the Q projection
    bq_s = (bq * scale).reshape(1, D)
    wk_t = Wk.T
    wv_t = Wv.T
    wo_t = Wo.T
    bk_2 = bk.reshape(1, D)
    bv_2 = bv.reshape(1, D)
    bo_2 = bo.reshape(1, D)

    # masked_fill(mask == 0, -1e9) -> additive bias (exact same post-softmax).
    if mask is None:
        bias = jnp.zeros((B, 1, SQ, SK), jnp.float32)
    else:
        bias = jnp.where(mask == 0, jnp.float32(-1e9), jnp.float32(0.0))

    full = lambda shape: pl.BlockSpec(shape, lambda b: tuple(0 for _ in shape))

    return pl.pallas_call(
        _mha_kernel,
        out_shape=jax.ShapeDtypeStruct((B, SQ, D), jnp.float32),
        grid=(B,),
        in_specs=[
            pl.BlockSpec((1, SQ, D), lambda b: (b, 0, 0)),     # Q
            pl.BlockSpec((1, SK, D), lambda b: (b, 0, 0)),     # K
            pl.BlockSpec((1, SK, D), lambda b: (b, 0, 0)),     # V
            pl.BlockSpec((1, 1, SQ, SK), lambda b: (b, 0, 0, 0)),  # mask bias
            full((D, D)),   # Wq^T (scaled)
            full((D, D)),   # Wk^T
            full((D, D)),   # Wv^T
            full((D, D)),   # Wo^T
            full((1, D)),   # bq (scaled)
            full((1, D)),   # bk
            full((1, D)),   # bv
            full((1, D)),   # bo
        ],
        out_specs=pl.BlockSpec((1, SQ, D), lambda b: (b, 0, 0)),
        compiler_params=pltpu.CompilerParams(
            dimension_semantics=("parallel",)),
    )(q, k, v, bias, wq_t, wk_t, wv_t, wo_t, bq_s, bk_2, bv_2, bo_2)


# ---------------- pure-JAX reference (mirror of the PyTorch forward) ----------------
def multi_head_attention_ref(q, k, v, mask, params):
    Wq, bq, Wk, bk, Wv, bv, Wo, bo = params

    def linear(x, W, b):
        return x @ W.T + b

    def split_heads(t):
        b_, s_, _ = t.shape
        return t.reshape(b_, s_, H, DK).transpose(0, 2, 1, 3)

    Qh = split_heads(linear(q, Wq, bq))
    Kh = split_heads(linear(k, Wk, bk))
    Vh = split_heads(linear(v, Wv, bv))
    scores = jnp.einsum("bhqd,bhkd->bhqk", Qh, Kh) / math.sqrt(DK)
    if mask is not None:
        scores = jnp.where(mask == 0, jnp.float32(-1e9), scores)
    probs = jax.nn.softmax(scores, axis=-1)
    out = jnp.einsum("bhqk,bhkd->bhqd", probs, Vh)
    out = out.transpose(0, 2, 1, 3).reshape(q.shape[0], -1, D)
    return linear(out, Wo, bo)


if __name__ == "__main__":
    key = jax.random.PRNGKey(0)
    ks = jax.random.split(key, 12)

    q = jax.random.normal(ks[0], (B, SQ, D), jnp.float32)
    k = jax.random.normal(ks[1], (B, SK, D), jnp.float32)
    v = jax.random.normal(ks[2], (B, SK, D), jnp.float32)

    # causal mask, broadcast over heads (0 = masked)
    mask = jnp.broadcast_to(
        jnp.tril(jnp.ones((SQ, SK), jnp.float32))[None, None], (B, 1, SQ, SK))

    scale = 0.1
    Wq = scale * jax.random.normal(ks[3], (D, D), jnp.float32)
    bq = scale * jax.random.normal(ks[4], (D,), jnp.float32)
    Wk = scale * jax.random.normal(ks[5], (D, D), jnp.float32)
    bk = scale * jax.random.normal(ks[6], (D,), jnp.float32)
    Wv = scale * jax.random.normal(ks[7], (D, D), jnp.float32)
    bv = scale * jax.random.normal(ks[8], (D,), jnp.float32)
    Wo = scale * jax.random.normal(ks[9], (D, D), jnp.float32)
    bo = scale * jax.random.normal(ks[10], (D,), jnp.float32)
    params = (Wq, bq, Wk, bk, Wv, bv, Wo, bo)

    out = multi_head_attention_pallas(q, k, v, mask, params)
    out = jax.block_until_ready(out)

    ref = multi_head_attention_ref(q, k, v, mask, params)
    np.testing.assert_allclose(np.asarray(out), np.asarray(ref),
                               rtol=2e-4, atol=2e-4)
    print("KERNEL_OK")
</pallas_src>

<mosaic_0001>
module attributes {stable_mosaic.version = 11 : i64} {
  func.func @_mha_kernel(%arg0: i32, %arg1: memref<1x8x32xf32, #tpu.memory_space<vmem>>, %arg2: memref<1x8x32xf32, #tpu.memory_space<vmem>>, %arg3: memref<1x8x32xf32, #tpu.memory_space<vmem>>, %arg4: memref<1x1x8x8xf32, #tpu.memory_space<vmem>>, %arg5: memref<32x32xf32, #tpu.memory_space<vmem>>, %arg6: memref<32x32xf32, #tpu.memory_space<vmem>>, %arg7: memref<32x32xf32, #tpu.memory_space<vmem>>, %arg8: memref<32x32xf32, #tpu.memory_space<vmem>>, %arg9: memref<1x32xf32, #tpu.memory_space<vmem>>, %arg10: memref<1x32xf32, #tpu.memory_space<vmem>>, %arg11: memref<1x32xf32, #tpu.memory_space<vmem>>, %arg12: memref<1x32xf32, #tpu.memory_space<vmem>>, %arg13: memref<1x8x32xf32, #tpu.memory_space<vmem>>) attributes {dimension_semantics = [#tpu.dimension_semantics<parallel>], iteration_bounds = array<i64: 2>, scalar_prefetch = 0 : i64, scratch_operands = 0 : i64, tpu.core_type = #tpu.core_type<tc>, window_params = [{transform_indices = @transform_0, window_bounds = array<i64: 1, 8, 32>}, {transform_indices = @transform_1, window_bounds = array<i64: 1, 8, 32>}, {transform_indices = @transform_2, window_bounds = array<i64: 1, 8, 32>}, {transform_indices = @transform_3, window_bounds = array<i64: 1, 1, 8, 8>}, {pipeline_mode = #tpu.pipeline_mode<synchronous>, transform_indices = @transform_4, window_bounds = array<i64: 32, 32>}, {pipeline_mode = #tpu.pipeline_mode<synchronous>, transform_indices = @transform_5, window_bounds = array<i64: 32, 32>}, {pipeline_mode = #tpu.pipeline_mode<synchronous>, transform_indices = @transform_6, window_bounds = array<i64: 32, 32>}, {pipeline_mode = #tpu.pipeline_mode<synchronous>, transform_indices = @transform_7, window_bounds = array<i64: 32, 32>}, {pipeline_mode = #tpu.pipeline_mode<synchronous>, transform_indices = @transform_8, window_bounds = array<i64: 1, 32>}, {pipeline_mode = #tpu.pipeline_mode<synchronous>, transform_indices = @transform_9, window_bounds = array<i64: 1, 32>}, {pipeline_mode = #tpu.pipeline_mode<synchronous>, transform_indices = @transform_10, window_bounds = array<i64: 1, 32>}, {pipeline_mode = #tpu.pipeline_mode<synchronous>, transform_indices = @transform_11, window_bounds = array<i64: 1, 32>}, {transform_indices = @transform_12, window_bounds = array<i64: 1, 8, 32>}]} {
    %c0 = arith.constant 0 : index
    %c0_0 = arith.constant 0 : index
    %c0_1 = arith.constant 0 : index
    %0 = vector.load %arg1[%c0, %c0_0, %c0_1] : memref<1x8x32xf32, #tpu.memory_space<vmem>>, vector<1x8x32xf32>
    %1 = vector.shape_cast %0 : vector<1x8x32xf32> to vector<8x32xf32>
    %c0_2 = arith.constant 0 : index
    %c0_3 = arith.constant 0 : index
    %c0_4 = arith.constant 0 : index
    %2 = vector.load %arg2[%c0_2, %c0_3, %c0_4] : memref<1x8x32xf32, #tpu.memory_space<vmem>>, vector<1x8x32xf32>
    %3 = vector.shape_cast %2 : vector<1x8x32xf32> to vector<8x32xf32>
    %c0_5 = arith.constant 0 : index
    %c0_6 = arith.constant 0 : index
    %c0_7 = arith.constant 0 : index
    %4 = vector.load %arg3[%c0_5, %c0_6, %c0_7] : memref<1x8x32xf32, #tpu.memory_space<vmem>>, vector<1x8x32xf32>
    %5 = vector.shape_cast %4 : vector<1x8x32xf32> to vector<8x32xf32>
    %c0_8 = arith.constant 0 : index
    %c0_9 = arith.constant 0 : index
    %c0_10 = arith.constant 0 : index
    %c0_11 = arith.constant 0 : index
    %6 = vector.load %arg4[%c0_8, %c0_9, %c0_10, %c0_11] : memref<1x1x8x8xf32, #tpu.memory_space<vmem>>, vector<1x1x8x8xf32>
    %7 = vector.shape_cast %6 : vector<1x1x8x8xf32> to vector<8x8xf32>
    %c0_12 = arith.constant 0 : index
    %c0_13 = arith.constant 0 : index
    %8 = vector.load %arg5[%c0_12, %c0_13] : memref<32x32xf32, #tpu.memory_space<vmem>>, vector<32x32xf32>
    %cst = arith.constant dense<0.000000e+00> : vector<8x32xf32>
    %9 = tpu.matmul %1, %8, %cst {dimension_numbers = #tpu.dot_dimension_numbers<[1], [0], [0], [1], [0, 0, 1, 1], [], []>} : vector<8x32xf32>, vector<32x32xf32>, vector<8x32xf32> -> vector<8x32xf32>
    %c0_14 = arith.constant 0 : index
    %c0_15 = arith.constant 0 : index
    %10 = vector.load %arg9[%c0_14, %c0_15] : memref<1x32xf32, #tpu.memory_space<vmem>>, vector<1x32xf32>
    %11 = vector.shape_cast %10 : vector<1x32xf32> to vector<32xf32>
    %12 = vector.shape_cast %11 : vector<32xf32> to vector<1x32xf32>
    %13 = vector.broadcast %12 : vector<1x32xf32> to vector<8x32xf32>
    %14 = arith.addf %9, %13 : vector<8x32xf32>
    %c0_16 = arith.constant 0 : index
    %c0_17 = arith.constant 0 : index
    %15 = vector.load %arg6[%c0_16, %c0_17] : memref<32x32xf32, #tpu.memory_space<vmem>>, vector<32x32xf32>
    %cst_18 = arith.constant dense<0.000000e+00> : vector<8x32xf32>
    %16 = tpu.matmul %3, %15, %cst_18 {dimension_numbers = #tpu.dot_dimension_numbers<[1], [0], [0], [1], [0, 0, 1, 1], [], []>} : vector<8x32xf32>, vector<32x32xf32>, vector<8x32xf32> -> vector<8x32xf32>
    %c0_19 = arith.constant 0 : index
    %c0_20 = arith.constant 0 : index
    %17 = vector.load %arg10[%c0_19, %c0_20] : memref<1x32xf32, #tpu.memory_space<vmem>>, vector<1x32xf32>
    %18 = vector.shape_cast %17 : vector<1x32xf32> to vector<32xf32>
    %19 = vector.shape_cast %18 : vector<32xf32> to vector<1x32xf32>
    %20 = vector.broadcast %19 : vector<1x32xf32> to vector<8x32xf32>
    %21 = arith.addf %16, %20 : vector<8x32xf32>
    %c0_21 = arith.constant 0 : index
    %c0_22 = arith.constant 0 : index
    %22 = vector.load %arg7[%c0_21, %c0_22] : memref<32x32xf32, #tpu.memory_space<vmem>>, vector<32x32xf32>
    %cst_23 = arith.constant dense<0.000000e+00> : vector<8x32xf32>
    %23 = tpu.matmul %5, %22, %cst_23 {dimension_numbers = #tpu.dot_dimension_numbers<[1], [0], [0], [1], [0, 0, 1, 1], [], []>} : vector<8x32xf32>, vector<32x32xf32>, vector<8x32xf32> -> vector<8x32xf32>
    %c0_24 = arith.constant 0 : index
    %c0_25 = arith.constant 0 : index
    %24 = vector.load %arg11[%c0_24, %c0_25] : memref<1x32xf32, #tpu.memory_space<vmem>>, vector<1x32xf32>
    %25 = vector.shape_cast %24 : vector<1x32xf32> to vector<32xf32>
    %26 = vector.shape_cast %25 : vector<32xf32> to vector<1x32xf32>
    %27 = vector.broadcast %26 : vector<1x32xf32> to vector<8x32xf32>
    %28 = arith.addf %23, %27 : vector<8x32xf32>
    %29 = vector.shape_cast %14 : vector<8x32xf32> to vector<8x4x8xf32>
    %30 = tpu.transpose %29, [1, 0, 2] : vector<8x4x8xf32> -> vector<4x8x8xf32>
    %31 = vector.shape_cast %21 : vector<8x32xf32> to vector<8x4x8xf32>
    %32 = tpu.transpose %31, [1, 0, 2] : vector<8x4x8xf32> -> vector<4x8x8xf32>
    %33 = vector.shape_cast %28 : vector<8x32xf32> to vector<8x4x8xf32>
    %34 = tpu.transpose %33, [1, 0, 2] : vector<8x4x8xf32> -> vector<4x8x8xf32>
    %cst_26 = arith.constant dense<0.000000e+00> : vector<4x8x8xf32>
    %35 = tpu.matmul %30, %32, %cst_26 {dimension_numbers = #tpu.dot_dimension_numbers<[2], [2], [1], [1], [0, 0, 0, 1, 1, 1], [0], [0]>} : vector<4x8x8xf32>, vector<4x8x8xf32>, vector<4x8x8xf32> -> vector<4x8x8xf32>
    %36 = vector.shape_cast %7 : vector<8x8xf32> to vector<1x8x8xf32>
    %37 = vector.broadcast %36 : vector<1x8x8xf32> to vector<4x8x8xf32>
    %38 = arith.addf %35, %37 : vector<4x8x8xf32>
    %cst_27 = arith.constant dense<0xFF800000> : vector<4x8xf32>
    %39 = vector.multi_reduction <maximumf>, %38, %cst_27 [2] : vector<4x8x8xf32> to vector<4x8xf32>
    %cst_28 = arith.constant 0xFF800000 : f32
    %40 = vector.broadcast %cst_28 : f32 to vector<4x8xf32>
    %41 = arith.maximumf %40, %39 : vector<4x8xf32>
    %42 = vector.shape_cast %41 : vector<4x8xf32> to vector<4x8x1xf32>
    %43 = vector.broadcast %42 : vector<4x8x1xf32> to vector<4x8x8xf32>
    %44 = arith.subf %38, %43 : vector<4x8x8xf32>
    %45 = math.exp %44 : vector<4x8x8xf32>
    %cst_29 = arith.constant dense<0.000000e+00> : vector<4x8xf32>
    %46 = vector.multi_reduction <add>, %45, %cst_29 [2] : vector<4x8x8xf32> to vector<4x8xf32>
    %47 = vector.shape_cast %46 : vector<4x8xf32> to vector<4x8x1xf32>
    %48 = vector.broadcast %47 : vector<4x8x1xf32> to vector<4x8x8xf32>
    %49 = arith.divf %45, %48 : vector<4x8x8xf32>
    %cst_30 = arith.constant dense<0.000000e+00> : vector<4x8x8xf32>
    %50 = tpu.matmul %49, %34, %cst_30 {dimension_numbers = #tpu.dot_dimension_numbers<[2], [1], [1], [2], [0, 0, 0, 1, 1, 2], [0], [0]>} : vector<4x8x8xf32>, vector<4x8x8xf32>, vector<4x8x8xf32> -> vector<4x8x8xf32>
    %51 = tpu.transpose %50, [1, 0, 2] : vector<4x8x8xf32> -> vector<8x4x8xf32>
    %52 = vector.shape_cast %51 : vector<8x4x8xf32> to vector<8x32xf32>
    %c0_31 = arith.constant 0 : index
    %c0_32 = arith.constant 0 : index
    %53 = vector.load %arg8[%c0_31, %c0_32] : memref<32x32xf32, #tpu.memory_space<vmem>>, vector<32x32xf32>
    %cst_33 = arith.constant dense<0.000000e+00> : vector<8x32xf32>
    %54 = tpu.matmul %52, %53, %cst_33 {dimension_numbers = #tpu.dot_dimension_numbers<[1], [0], [0], [1], [0, 0, 1, 1], [], []>} : vector<8x32xf32>, vector<32x32xf32>, vector<8x32xf32> -> vector<8x32xf32>
    %c0_34 = arith.constant 0 : index
    %c0_35 = arith.constant 0 : index
    %55 = vector.load %arg12[%c0_34, %c0_35] : memref<1x32xf32, #tpu.memory_space<vmem>>, vector<1x32xf32>
    %56 = vector.shape_cast %55 : vector<1x32xf32> to vector<32xf32>
    %57 = vector.shape_cast %56 : vector<32xf32> to vector<1x32xf32>
    %58 = vector.broadcast %57 : vector<1x32xf32> to vector<8x32xf32>
    %59 = arith.addf %54, %58 : vector<8x32xf32>
    %c0_36 = arith.constant 0 : index
    %c0_37 = arith.constant 0 : index
    %c0_38 = arith.constant 0 : index
    %60 = vector.load %arg13[%c0_36, %c0_37, %c0_38] : memref<1x8x32xf32, #tpu.memory_space<vmem>>, vector<1x8x32xf32>
    %61 = vector.shape_cast %60 : vector<1x8x32xf32> to vector<8x32xf32>
    %62 = vector.shape_cast %59 : vector<8x32xf32> to vector<1x8x32xf32>
    tpu.vector_store %arg13[%c0_36, %c0_37, %c0_38], %62 {strides = array<i32>} : memref<1x8x32xf32, #tpu.memory_space<vmem>>, vector<1x8x32xf32>,
    return
  }
  func.func @transform_0(%arg0: i32) -> (i32, i32, i32) {
    %c0_i32 = arith.constant 0 : i32
    %c0_i32_0 = arith.constant 0 : i32
    %c0_i32_1 = arith.constant 0 : i32
    return %arg0, %c0_i32, %c0_i32_0 : i32, i32, i32
  }
  func.func @transform_1(%arg0: i32) -> (i32, i32, i32) {
    %c0_i32 = arith.constant 0 : i32
    %c0_i32_0 = arith.constant 0 : i32
    %c0_i32_1 = arith.constant 0 : i32
    return %arg0, %c0_i32, %c0_i32_0 : i32, i32, i32
  }
  func.func @transform_2(%arg0: i32) -> (i32, i32, i32) {
    %c0_i32 = arith.constant 0 : i32
    %c0_i32_0 = arith.constant 0 : i32
    %c0_i32_1 = arith.constant 0 : i32
    return %arg0, %c0_i32, %c0_i32_0 : i32, i32, i32
  }
  func.func @transform_3(%arg0: i32) -> (i32, i32, i32, i32) {
    %c0_i32 = arith.constant 0 : i32
    %c0_i32_0 = arith.constant 0 : i32
    %c0_i32_1 = arith.constant 0 : i32
    %c0_i32_2 = arith.constant 0 : i32
    return %arg0, %c0_i32, %c0_i32_0, %c0_i32_1 : i32, i32, i32, i32
  }
  func.func @transform_4(%arg0: i32) -> (i32, i32) {
    %c0_i32 = arith.constant 0 : i32
    %c0_i32_0 = arith.constant 0 : i32
    %c0_i32_1 = arith.constant 0 : i32
    return %c0_i32, %c0_i32_0 : i32, i32
  }
  func.func @transform_5(%arg0: i32) -> (i32, i32) {
    %c0_i32 = arith.constant 0 : i32
    %c0_i32_0 = arith.constant 0 : i32
    %c0_i32_1 = arith.constant 0 : i32
    return %c0_i32, %c0_i32_0 : i32, i32
  }
  func.func @transform_6(%arg0: i32) -> (i32, i32) {
    %c0_i32 = arith.constant 0 : i32
    %c0_i32_0 = arith.constant 0 : i32
    %c0_i32_1 = arith.constant 0 : i32
    return %c0_i32, %c0_i32_0 : i32, i32
  }
  func.func @transform_7(%arg0: i32) -> (i32, i32) {
    %c0_i32 = arith.constant 0 : i32
    %c0_i32_0 = arith.constant 0 : i32
    %c0_i32_1 = arith.constant 0 : i32
    return %c0_i32, %c0_i32_0 : i32, i32
  }
  func.func @transform_8(%arg0: i32) -> (i32, i32) {
    %c0_i32 = arith.constant 0 : i32
    %c0_i32_0 = arith.constant 0 : i32
    %c0_i32_1 = arith.constant 0 : i32
    return %c0_i32, %c0_i32_0 : i32, i32
  }
  func.func @transform_9(%arg0: i32) -> (i32, i32) {
    %c0_i32 = arith.constant 0 : i32
    %c0_i32_0 = arith.constant 0 : i32
    %c0_i32_1 = arith.constant 0 : i32
    return %c0_i32, %c0_i32_0 : i32, i32
  }
  func.func @transform_10(%arg0: i32) -> (i32, i32) {
    %c0_i32 = arith.constant 0 : i32
    %c0_i32_0 = arith.constant 0 : i32
    %c0_i32_1 = arith.constant 0 : i32
    return %c0_i32, %c0_i32_0 : i32, i32
  }
  func.func @transform_11(%arg0: i32) -> (i32, i32) {
    %c0_i32 = arith.constant 0 : i32
    %c0_i32_0 = arith.constant 0 : i32
    %c0_i32_1 = arith.constant 0 : i32
    return %c0_i32, %c0_i32_0 : i32, i32
  }
  func.func @transform_12(%arg0: i32) -> (i32, i32, i32) {
    %c0_i32 = arith.constant 0 : i32
    %c0_i32_0 = arith.constant 0 : i32
    %c0_i32_1 = arith.constant 0 : i32
    return %arg0, %c0_i32, %c0_i32_0 : i32, i32, i32
  }
}

</mosaic_0001>

<llo_original>
// kernel: tpu_custom_call.1
$region0: #{tpu_custom_call.1}
  #allocation0 [shape = 'u32[]', space=smem, size = 0x4, offset = 0x4, fixed_abs, tag = 'smem constant byte address 0x4 - core index']
  #allocation1 [shape = 'u32[72,128]{1,0:T(1,128)}', space=vmem, size = 0x9000, scoped, tag = 'internal scratch']
  %s0 = inlined_call_operand.hbm [shape: f32[2,8,32], index: 0, kind: input, shape index: {}]
  %s1 = inlined_call_operand.hbm [shape: f32[2,8,32], index: 1, kind: input, shape index: {}]
  %s2 = inlined_call_operand.hbm [shape: f32[2,8,32], index: 2, kind: input, shape index: {}]
  %s3 = inlined_call_operand.hbm [shape: f32[2,1,8,8], index: 3, kind: input, shape index: {}]
  %s4 = inlined_call_operand.hbm [shape: f32[32,32], index: 4, kind: input, shape index: {}]
  %s5 = inlined_call_operand.hbm [shape: f32[32,32], index: 5, kind: input, shape index: {}]
  %s6 = inlined_call_operand.hbm [shape: f32[32,32], index: 6, kind: input, shape index: {}]
  %s7 = inlined_call_operand.hbm [shape: f32[32,32], index: 7, kind: input, shape index: {}]
  %s8 = inlined_call_operand.vmem [shape: f32[1,32], index: 8, kind: input, shape index: {}]
  %s9 = inlined_call_operand.vmem [shape: f32[1,32], index: 9, kind: input, shape index: {}]
  %s10 = inlined_call_operand.vmem [shape: f32[1,32], index: 10, kind: input, shape index: {}]
  %s11 = inlined_call_operand.vmem [shape: f32[1,32], index: 11, kind: input, shape index: {}]
  %s12 = inlined_call_operand.hbm [shape: f32[2,8,32], index: 12, kind: output, shape index: {}]
  %s13 = sld [smem:[#allocation0]]
  $region113: #{tpu_custom_call.1} parent=0
    _
  %s15 = ssub.s32 1, %s13
  %s16 = scalar_select 0, %s15, %s13
  $region1: #{tpu_custom_call.1} parent=0
    #allocation2 [shape = 'u8[8192]{0}', space=vmem, size = 0x2000, scoped, tag = 'input window, operand 0']
    #allocation3 [shape = 's32[2]{0}', space=sflag, size = 0x8, scoped, tag = 'scoped memory for tpu_custom_call.1']
    #allocation4 [shape = 's32[2]{0}', space=sflag, size = 0x8, scoped, tag = 'scoped memory for tpu_custom_call.1']
    #allocation5 [shape = 'u8[8192]{0}', space=vmem, size = 0x2000, scoped, tag = 'input window, operand 1']
    #allocation6 [shape = 's32[2]{0}', space=sflag, size = 0x8, scoped, tag = 'scoped memory for tpu_custom_call.1']
    #allocation7 [shape = 'u8[8192]{0}', space=vmem, size = 0x2000, scoped, tag = 'input window, operand 2']
    #allocation8 [shape = 'u8[8192]{0}', space=vmem, size = 0x2000, scoped, tag = 'input window, operand 3']
    #allocation9 [shape = 's32[2]{0}', space=sflag, size = 0x8, scoped, tag = 'scoped memory for tpu_custom_call.1']
    #allocation10 [shape = 'u8[16384]{0}', space=vmem, size = 0x4000, scoped, tag = 'input window, operand 4, single buffered']
    #allocation11 [shape = 'u8[16384]{0}', space=vmem, size = 0x4000, scoped, tag = 'input window, operand 5, single buffered']
    #allocation12 [shape = 's32[1]{0}', space=sflag, size = 0x4, scoped, tag = 'scoped memory for tpu_custom_call.1']
    #allocation13 [shape = 'u8[16384]{0}', space=vmem, size = 0x4000, scoped, tag = 'input window, operand 6, single buffered']
    #allocation14 [shape = 'u8[16384]{0}', space=vmem, size = 0x4000, scoped, tag = 'input window, operand 7, single buffered']
    #allocation15 [shape = 's32[1]{0}', space=sflag, size = 0x4, scoped, tag = 'scoped memory for tpu_custom_call.1']
    #allocation16 [shape = 'u8[8192]{0}', space=vmem, size = 0x2000, scoped, tag = 'output window, operand 0']
    %17 = vsyncpa [#allocation3], 0
    %s18 = scalar_lea.sflag [#allocation3], 1
    %19 = vsyncpa %s18, 0
    %20 = vsyncpa [#allocation6], 0
    %s21 = scalar_lea.sflag [#allocation6], 1
    %22 = vsyncpa %s21, 0
    %23 = vsyncpa [#allocation9], 0
    %s24 = scalar_lea.sflag [#allocation9], 1
    %25 = vsyncpa %s24, 0
    %26 = vsyncpa [#allocation12], 0
    %27 = vsyncpa [#allocation15], 0
    %28 = vsyncpa [#allocation4], 0
    %s29 = scalar_lea.sflag [#allocation4], 1
    %30 = vsyncpa %s29, 0
    loop: start=0, step=1, limit=4
    $region2: #{tpu_custom_call.1} parent=1 // loop_pre_header
      _
    $region3: #{tpu_custom_call.1} parent=1 // loop_header
      %s32 = sphi 0, %s36
      %p33 = scmp.ge.s32.totalorder %s32, 4
      %s42 = sphi 0, %s44
      %s45 = sphi 0, %s42
      %s46 = sphi 0, %s45
      %s62 = sphi 0, %s46
      %s68 = sphi 0, %s70
      %s71 = sphi 0, %s68
      %s72 = sphi 0, %s71
      %s88 = sphi 0, %s72
      %s94 = sphi 0, %s96
      %s97 = sphi 0, %s94
      %s98 = sphi 0, %s97
      %s114 = sphi 0, %s98
      %s120 = sphi 0, %s122
      %s123 = sphi 0, %s120
      %s124 = sphi 0, %s123
      %s140 = sphi 0, %s124
      %s144 = sphi 0, %s144
      %s146 = sphi 0, %s144
      %s147 = sphi 0, %s146
      %s161 = sphi 0, %s147
      %s165 = sphi 0, %s165
      %s167 = sphi 0, %s165
      %s168 = sphi 0, %s167
      %s182 = sphi 0, %s168
      %s186 = sphi 0, %s186
      %s188 = sphi 0, %s186
      %s189 = sphi 0, %s188
      %s203 = sphi 0, %s189
      %s207 = sphi 0, %s207
      %s209 = sphi 0, %s207
      %s210 = sphi 0, %s209
      %s224 = sphi 0, %s210
      %s228 = sphi 0, %s228
      %s230 = sphi 0, %s228
      %s231 = sphi 0, %s230
      %s245 = sphi 0, %s231
      %s249 = sphi 0, %s249
      %s251 = sphi 0, %s249
      %s252 = sphi 0, %s251
      %s266 = sphi 0, %s252
      %s270 = sphi 0, %s270
      %s272 = sphi 0, %s270
      %s273 = sphi 0, %s272
      %s287 = sphi 0, %s273
      %s291 = sphi 0, %s291
      %s293 = sphi 0, %s291
      %s294 = sphi 0, %s293
      %s308 = sphi 0, %s294
      %s314 = sphi 0, %s316
      %s317 = sphi 0, %s314
      %s318 = sphi 0, %s317
      %s334 = sphi 0, %s318
    $region4: #{tpu_custom_call.1} parent=1 // loop_header_branch
      %35 = sbr.rel (%p33) target = $region8
    $region5: #{tpu_custom_call.1} parent=1 // loop_body
      %s37 = ssub.s32 %s32, 1
      %s38 = ssub.s32 %s32, 2
      %s39 = sadd.s32 %s32, 1
      %s40 = ssub.s32 %s32, %s39
      %p41 = scmp.eq.s32.totalorder %s40, 0
      %s43 = sadd.s32 %s42, 1
      %s44 = scalar_select %p41, %s42, %s43
      %p47 = pneg %p41
      %p48 = scmp.eq.s32.totalorder %s32, 1
      %p49 = por %p47, %p48
      %p50 = scmp.ne.s32.totalorder %s42, %s45
      %p51 = scmp.eq.s32.totalorder %s32, 0
      %p52 = por %p50, %p51
      %p53 = scmp.ne.s32.totalorder %s42, %s45
      %p54 = scmp.eq.s32.totalorder %s37, 1
      %p55 = por %p53, %p54
      %p56 = scmp.ne.s32.totalorder %s45, %s46
      %p57 = scmp.eq.s32.totalorder %s37, 0
      %p58 = por %p56, %p57
      %p59 = scmp.ne.s32.totalorder %s45, %s46
      %p60 = scmp.eq.s32.totalorder %s38, 1
      %p61 = por %p59, %p60
      %p63 = scmp.ne.s32.totalorder %s46, %s62
      %p64 = scmp.eq.s32.totalorder %s38, 0
      %p65 = por %p63, %p64
      %s66 = ssub.s32 %s32, %s39
      %p67 = scmp.eq.s32.totalorder %s66, 0
      %s69 = sadd.s32 %s68, 1
      %s70 = scalar_select %p67, %s68, %s69
      %p73 = pneg %p67
      %p74 = scmp.eq.s32.totalorder %s32, 1
      %p75 = por %p73, %p74
      %p76 = scmp.ne.s32.totalorder %s68, %s71
      %p77 = scmp.eq.s32.totalorder %s32, 0
      %p78 = por %p76, %p77
      %p79 = scmp.ne.s32.totalorder %s68, %s71
      %p80 = scmp.eq.s32.totalorder %s37, 1
      %p81 = por %p79, %p80
      %p82 = scmp.ne.s32.totalorder %s71, %s72
      %p83 = scmp.eq.s32.totalorder %s37, 0
      %p84 = por %p82, %p83
      %p85 = scmp.ne.s32.totalorder %s71, %s72
      %p86 = scmp.eq.s32.totalorder %s38, 1
      %p87 = por %p85, %p86
      %p89 = scmp.ne.s32.totalorder %s72, %s88
      %p90 = scmp.eq.s32.totalorder %s38, 0
      %p91 = por %p89, %p90
      %s92 = ssub.s32 %s32, %s39
      %p93 = scmp.eq.s32.totalorder %s92, 0
      %s95 = sadd.s32 %s94, 1
      %s96 = scalar_select %p93, %s94, %s95
      %p99 = pneg %p93
      %p100 = scmp.eq.s32.totalorder %s32, 1
      %p101 = por %p99, %p100
      %p102 = scmp.ne.s32.totalorder %s94, %s97
      %p103 = scmp.eq.s32.totalorder %s32, 0
      %p104 = por %p102, %p103
      %p105 = scmp.ne.s32.totalorder %s94, %s97
      %p106 = scmp.eq.s32.totalorder %s37, 1
      %p107 = por %p105, %p106
      %p108 = scmp.ne.s32.totalorder %s97, %s98
      %p109 = scmp.eq.s32.totalorder %s37, 0
      %p110 = por %p108, %p109
      %p111 = scmp.ne.s32.totalorder %s97, %s98
      %p112 = scmp.eq.s32.totalorder %s38, 1
      %p113 = por %p111, %p112
      %p115 = scmp.ne.s32.totalorder %s98, %s114
      %p116 = scmp.eq.s32.totalorder %s38, 0
      %p117 = por %p115, %p116
      %s118 = ssub.s32 %s32, %s39
      %p119 = scmp.eq.s32.totalorder %s118, 0
      %s121 = sadd.s32 %s120, 1
      %s122 = scalar_select %p119, %s120, %s121
      %p125 = pneg %p119
      %p126 = scmp.eq.s32.totalorder %s32, 1
      %p127 = por %p125, %p126
      %p128 = scmp.ne.s32.totalorder %s120, %s123
      %p129 = scmp.eq.s32.totalorder %s32, 0
      %p130 = por %p128, %p129
      %p131 = scmp.ne.s32.totalorder %s120, %s123
      %p132 = scmp.eq.s32.totalorder %s37, 1
      %p133 = por %p131, %p132
      %p134 = scmp.ne.s32.totalorder %s123, %s124
      %p135 = scmp.eq.s32.totalorder %s37, 0
      %p136 = por %p134, %p135
      %p137 = scmp.ne.s32.totalorder %s123, %s124
      %p138 = scmp.eq.s32.totalorder %s38, 1
      %p139 = por %p137, %p138
      %p141 = scmp.ne.s32.totalorder %s124, %s140
      %p142 = scmp.eq.s32.totalorder %s38, 0
      %p143 = por %p141, %p142
      %s145 = sadd.s32 %s144, 1
      %p148 = scmp.eq.s32.totalorder %s32, 1
      %p149 = scmp.ne.s32.totalorder %s144, %s146
      %p150 = scmp.eq.s32.totalorder %s32, 0
      %p151 = por %p149, %p150
      %p152 = scmp.ne.s32.totalorder %s144, %s146
      %p153 = scmp.eq.s32.totalorder %s37, 1
      %p154 = por %p152, %p153
      %p155 = scmp.ne.s32.totalorder %s146, %s147
      %p156 = scmp.eq.s32.totalorder %s37, 0
      %p157 = por %p155, %p156
      %p158 = scmp.ne.s32.totalorder %s146, %s147
      %p159 = scmp.eq.s32.totalorder %s38, 1
      %p160 = por %p158, %p159
      %p162 = scmp.ne.s32.totalorder %s147, %s161
      %p163 = scmp.eq.s32.totalorder %s38, 0
      %p164 = por %p162, %p163
      %s166 = sadd.s32 %s165, 1
      %p169 = scmp.eq.s32.totalorder %s32, 1
      %p170 = scmp.ne.s32.totalorder %s165, %s167
      %p171 = scmp.eq.s32.totalorder %s32, 0
      %p172 = por %p170, %p171
      %p173 = scmp.ne.s32.totalorder %s165, %s167
      %p174 = scmp.eq.s32.totalorder %s37, 1
      %p175 = por %p173, %p174
      %p176 = scmp.ne.s32.totalorder %s167, %s168
      %p177 = scmp.eq.s32.totalorder %s37, 0
      %p178 = por %p176, %p177
      %p179 = scmp.ne.s32.totalorder %s167, %s168
      %p180 = scmp.eq.s32.totalorder %s38, 1
      %p181 = por %p179, %p180
      %p183 = scmp.ne.s32.totalorder %s168, %s182
      %p184 = scmp.eq.s32.totalorder %s38, 0
      %p185 = por %p183, %p184
      %s187 = sadd.s32 %s186, 1
      %p190 = scmp.eq.s32.totalorder %s32, 1
      %p191 = scmp.ne.s32.totalorder %s186, %s188
      %p192 = scmp.eq.s32.totalorder %s32, 0
      %p193 = por %p191, %p192
      %p194 = scmp.ne.s32.totalorder %s186, %s188
      %p195 = scmp.eq.s32.totalorder %s37, 1
      %p196 = por %p194, %p195
      %p197 = scmp.ne.s32.totalorder %s188, %s189
      %p198 = scmp.eq.s32.totalorder %s37, 0
      %p199 = por %p197, %p198
      %p200 = scmp.ne.s32.totalorder %s188, %s189
      %p201 = scmp.eq.s32.totalorder %s38, 1
      %p202 = por %p200, %p201
      %p204 = scmp.ne.s32.totalorder %s189, %s203
      %p205 = scmp.eq.s32.totalorder %s38, 0
      %p206 = por %p204, %p205
      %s208 = sadd.s32 %s207, 1
      %p211 = scmp.eq.s32.totalorder %s32, 1
      %p212 = scmp.ne.s32.totalorder %s207, %s209
      %p213 = scmp.eq.s32.totalorder %s32, 0
      %p214 = por %p212, %p213
      %p215 = scmp.ne.s32.totalorder %s207, %s209
      %p216 = scmp.eq.s32.totalorder %s37, 1
      %p217 = por %p215, %p216
      %p218 = scmp.ne.s32.totalorder %s209, %s210
      %p219 = scmp.eq.s32.totalorder %s37, 0
      %p220 = por %p218, %p219
      %p221 = scmp.ne.s32.totalorder %s209, %s210
      %p222 = scmp.eq.s32.totalorder %s38, 1
      %p223 = por %p221, %p222
      %p225 = scmp.ne.s32.totalorder %s210, %s224
      %p226 = scmp.eq.s32.totalorder %s38, 0
      %p227 = por %p225, %p226
      %s229 = sadd.s32 %s228, 1
      %p232 = scmp.eq.s32.totalorder %s32, 1
      %p233 = scmp.ne.s32.totalorder %s228, %s230
      %p234 = scmp.eq.s32.totalorder %s32, 0
      %p235 = por %p233, %p234
      %p236 = scmp.ne.s32.totalorder %s228, %s230
      %p237 = scmp.eq.s32.totalorder %s37, 1
      %p238 = por %p236, %p237
      %p239 = scmp.ne.s32.totalorder %s230, %s231
      %p240 = scmp.eq.s32.totalorder %s37, 0
      %p241 = por %p239, %p240
      %p242 = scmp.ne.s32.totalorder %s230, %s231
      %p243 = scmp.eq.s32.totalorder %s38, 1
      %p244 = por %p242, %p243
      %p246 = scmp.ne.s32.totalorder %s231, %s245
      %p247 = scmp.eq.s32.totalorder %s38, 0
      %p248 = por %p246, %p247
      %s250 = sadd.s32 %s249, 1
      %p253 = scmp.eq.s32.totalorder %s32, 1
      %p254 = scmp.ne.s32.totalorder %s249, %s251
      %p255 = scmp.eq.s32.totalorder %s32, 0
      %p256 = por %p254, %p255
      %p257 = scmp.ne.s32.totalorder %s249, %s251
      %p258 = scmp.eq.s32.totalorder %s37, 1
      %p259 = por %p257, %p258
      %p260 = scmp.ne.s32.totalorder %s251, %s252
      %p261 = scmp.eq.s32.totalorder %s37, 0
      %p262 = por %p260, %p261
      %p263 = scmp.ne.s32.totalorder %s251, %s252
      %p264 = scmp.eq.s32.totalorder %s38, 1
      %p265 = por %p263, %p264
      %p267 = scmp.ne.s32.totalorder %s252, %s266
      %p268 = scmp.eq.s32.totalorder %s38, 0
      %p269 = por %p267, %p268
      %s271 = sadd.s32 %s270, 1
      %p274 = scmp.eq.s32.totalorder %s32, 1
      %p275 = scmp.ne.s32.totalorder %s270, %s272
      %p276 = scmp.eq.s32.totalorder %s32, 0
      %p277 = por %p275, %p276
      %p278 = scmp.ne.s32.totalorder %s270, %s272
      %p279 = scmp.eq.s32.totalorder %s37, 1
      %p280 = por %p278, %p279
      %p281 = scmp.ne.s32.totalorder %s272, %s273
      %p282 = scmp.eq.s32.totalorder %s37, 0
      %p283 = por %p281, %p282
      %p284 = scmp.ne.s32.totalorder %s272, %s273
      %p285 = scmp.eq.s32.totalorder %s38, 1
      %p286 = por %p284, %p285
      %p288 = scmp.ne.s32.totalorder %s273, %s287
      %p289 = scmp.eq.s32.totalorder %s38, 0
      %p290 = por %p288, %p289
      %s292 = sadd.s32 %s291, 1
      %p295 = scmp.eq.s32.totalorder %s32, 1
      %p296 = scmp.ne.s32.totalorder %s291, %s293
      %p297 = scmp.eq.s32.totalorder %s32, 0
      %p298 = por %p296, %p297
      %p299 = scmp.ne.s32.totalorder %s291, %s293
      %p300 = scmp.eq.s32.totalorder %s37, 1
      %p301 = por %p299, %p300
      %p302 = scmp.ne.s32.totalorder %s293, %s294
      %p303 = scmp.eq.s32.totalorder %s37, 0
      %p304 = por %p302, %p303
      %p305 = scmp.ne.s32.totalorder %s293, %s294
      %p306 = scmp.eq.s32.totalorder %s38, 1
      %p307 = por %p305, %p306
      %p309 = scmp.ne.s32.totalorder %s294, %s308
      %p310 = scmp.eq.s32.totalorder %s38, 0
      %p311 = por %p309, %p310
      %s312 = ssub.s32 %s32, %s39
      %p313 = scmp.eq.s32.totalorder %s312, 0
      %s315 = sadd.s32 %s314, 1
      %s316 = scalar_select %p313, %s314, %s315
      %p319 = pneg %p313
      %p320 = scmp.eq.s32.totalorder %s32, 1
      %p321 = por %p319, %p320
      %p322 = scmp.ne.s32.totalorder %s314, %s317
      %p323 = scmp.eq.s32.totalorder %s32, 0
      %p324 = por %p322, %p323
      %p325 = scmp.ne.s32.totalorder %s314, %s317
      %p326 = scmp.eq.s32.totalorder %s37, 1
      %p327 = por %p325, %p326
      %p328 = scmp.ne.s32.totalorder %s317, %s318
      %p329 = scmp.eq.s32.totalorder %s37, 0
      %p330 = por %p328, %p329
      %p331 = scmp.ne.s32.totalorder %s317, %s318
      %p332 = scmp.eq.s32.totalorder %s38, 1
      %p333 = por %p331, %p332
      %p335 = scmp.ne.s32.totalorder %s318, %s334
      %p336 = scmp.eq.s32.totalorder %s38, 0
      %p337 = por %p335, %p336
      %p338 = scmp.le.s32.totalorder 1, %s32
      %p339 = scmp.lt.s32.totalorder %s32, 3
      %p340 = pnand %p338, %p339
      %p341 = pneg %p340
      // Predicated region
      $region9: #{tpu_custom_call.1} parent=5 // pred_check
        _
      $region10: #{tpu_custom_call.1} parent=5 // pred_check_branch
        %343 = sbr.rel (%p340) target = $region12
      $region11: #{tpu_custom_call.1} parent=5 // pred_region
        %s344 = ssub.s32 %s32, 1
        // Predicated region
        $region13: #{tpu_custom_call.1} parent=11 // pred_check
          %p345 = pneg %p157
        $region14: #{tpu_custom_call.1} parent=11 // pred_check_branch
          %347 = sbr.rel (%p345) target = $region16
        $region15: #{tpu_custom_call.1} parent=11 // pred_region
          %349 = vsyncadd [#allocation9], 0
          %s350 = sshll.u32 %s4, 4
          %s351 = int_to_ptr.hbm [resolvable:$true] %s350
          %s352 = sshll.u32 [#allocation10], 4
          %s353 = int_to_ptr.vmem [resolvable:$true] %s352
          %358 = dma.hbm_to_vmem [thread:$0]  %s351, 512, %s353, [#allocation9], 128, 128, 8
        $region16: #{tpu_custom_call.1} parent=11 // pred_fallthru
          _
        // Predicated region
        $region17: #{tpu_custom_call.1} parent=11 // pred_check
          %p359 = pneg %p178
        $region18: #{tpu_custom_call.1} parent=11 // pred_check_branch
          %361 = sbr.rel (%p359) target = $region20
        $region19: #{tpu_custom_call.1} parent=11 // pred_region
          %363 = vsyncadd [#allocation12], 0
          %s364 = sshll.u32 %s5, 4
          %s365 = int_to_ptr.hbm [resolvable:$true] %s364
          %s366 = sshll.u32 [#allocation11], 4
          %s367 = int_to_ptr.vmem [resolvable:$true] %s366
          %372 = dma.hbm_to_vmem [thread:$0]  %s365, 512, %s367, [#allocation12], 128, 128, 8
        $region20: #{tpu_custom_call.1} parent=11 // pred_fallthru
          _
        // Predicated region
        $region21: #{tpu_custom_call.1} parent=11 // pred_check
          %p373 = pneg %p199
        $region22: #{tpu_custom_call.1} parent=11 // pred_check_branch
          %375 = sbr.rel (%p373) target = $region24
        $region23: #{tpu_custom_call.1} parent=11 // pred_region
          %377 = vsyncadd [#allocation12], 0
          %s378 = sshll.u32 %s6, 4
          %s379 = int_to_ptr.hbm [resolvable:$true] %s378
          %s380 = sshll.u32 [#allocation13], 4
          %s381 = int_to_ptr.vmem [resolvable:$true] %s380
          %386 = dma.hbm_to_vmem [thread:$0]  %s379, 512, %s381, [#allocation12], 128, 128, 8
        $region24: #{tpu_custom_call.1} parent=11 // pred_fallthru
          _
        // Predicated region
        $region25: #{tpu_custom_call.1} parent=11 // pred_check
          %p387 = pneg %p220
        $region26: #{tpu_custom_call.1} parent=11 // pred_check_branch
          %389 = sbr.rel (%p387) target = $region28
        $region27: #{tpu_custom_call.1} parent=11 // pred_region
          %391 = vsyncadd [#allocation15], 0
          %s392 = sshll.u32 %s7, 4
          %s393 = int_to_ptr.hbm [resolvable:$true] %s392
          %s394 = sshll.u32 [#allocation14], 4
          %s395 = int_to_ptr.vmem [resolvable:$true] %s394
          %400 = dma.hbm_to_vmem [thread:$0]  %s393, 512, %s395, [#allocation15], 128, 128, 8
        $region28: #{tpu_custom_call.1} parent=11 // pred_fallthru
          _
        // Predicated region
        $region29: #{tpu_custom_call.1} parent=11 // pred_check
          %p401 = pneg %p241
        $region30: #{tpu_custom_call.1} parent=11 // pred_check_branch
          %403 = sbr.rel (%p401) target = $region32
        $region31: #{tpu_custom_call.1} parent=11 // pred_region
          _
        $region32: #{tpu_custom_call.1} parent=11 // pred_fallthru
          _
        // Predicated region
        $region33: #{tpu_custom_call.1} parent=11 // pred_check
          %p404 = pneg %p262
        $region34: #{tpu_custom_call.1} parent=11 // pred_check_branch
          %406 = sbr.rel (%p404) target = $region36
        $region35: #{tpu_custom_call.1} parent=11 // pred_region
          _
        $region36: #{tpu_custom_call.1} parent=11 // pred_fallthru
          _
        // Predicated region
        $region37: #{tpu_custom_call.1} parent=11 // pred_check
          %p407 = pneg %p283
        $region38: #{tpu_custom_call.1} parent=11 // pred_check_branch
          %409 = sbr.rel (%p407) target = $region40
        $region39: #{tpu_custom_call.1} parent=11 // pred_region
          _
        $region40: #{tpu_custom_call.1} parent=11 // pred_fallthru
          _
        // Predicated region
        $region41: #{tpu_custom_call.1} parent=11 // pred_check
          %p410 = pneg %p304
        $region42: #{tpu_custom_call.1} parent=11 // pred_check_branch
          %412 = sbr.rel (%p410) target = $region44
        $region43: #{tpu_custom_call.1} parent=11 // pred_region
          _
        $region44: #{tpu_custom_call.1} parent=11 // pred_fallthru
          _
      $region12: #{tpu_custom_call.1} parent=5 // pred_fallthru
        _
      %p413 = scmp.lt.s32.totalorder %s32, 2
      // Predicated region
      $region45: #{tpu_custom_call.1} parent=5 // pred_check
        %p414 = pneg %p413
      $region46: #{tpu_custom_call.1} parent=5 // pred_check_branch
        %416 = sbr.rel (%p414) target = $region48
      $region47: #{tpu_custom_call.1} parent=5 // pred_region
        // Predicated region
        $region49: #{tpu_custom_call.1} parent=47 // pred_check
          %p417 = pneg %p52
        $region50: #{tpu_custom_call.1} parent=47 // pred_check_branch
          %419 = sbr.rel (%p417) target = $region52
        $region51: #{tpu_custom_call.1} parent=47 // pred_region
          %s420 = sand.u32 %s42, 1
          %s421 = scalar_lea.sflag [#allocation3], %s420
          %s422 = sand.u32 %s42, 1
          %s423 = smul.addr %s422, 8
          %s424 = scalar_lea.vmem [#allocation2], %s423
          %426 = vsyncadd %s421, 0
          %s427 = smul.addr %s32, 8
          %s428 = scalar_lea.hbm %s0, %s427
          %s430 = sshll.u32 %s428, 4
          %s431 = int_to_ptr.hbm [resolvable:$true] %s430
          %s432 = sshll.u32 %s424, 4
          %s433 = int_to_ptr.vmem [resolvable:$true] %s432
          %435 = dma.hbm_to_vmem [thread:$0]  %s431, 128, %s433, %s421
        $region52: #{tpu_custom_call.1} parent=47 // pred_fallthru
          _
        // Predicated region
        $region53: #{tpu_custom_call.1} parent=47 // pred_check
          %p436 = pneg %p78
        $region54: #{tpu_custom_call.1} parent=47 // pred_check_branch
          %438 = sbr.rel (%p436) target = $region56
        $region55: #{tpu_custom_call.1} parent=47 // pred_region
          %s439 = sand.u32 %s32, 1
          %s440 = scalar_lea.sflag [#allocation6], %s439
          %s441 = sand.u32 %s68, 1
          %s442 = smul.addr %s441, 8
          %s443 = scalar_lea.vmem [#allocation5], %s442
          %445 = vsyncadd %s440, 0
          %s446 = smul.addr %s32, 8
          %s447 = scalar_lea.hbm %s1, %s446
          %s449 = sshll.u32 %s447, 4
          %s450 = int_to_ptr.hbm [resolvable:$true] %s449
          %s451 = sshll.u32 %s443, 4
          %s452 = int_to_ptr.vmem [resolvable:$true] %s451
          %454 = dma.hbm_to_vmem [thread:$0]  %s450, 128, %s452, %s440
        $region56: #{tpu_custom_call.1} parent=47 // pred_fallthru
          _
        // Predicated region
        $region57: #{tpu_custom_call.1} parent=47 // pred_check
          %p455 = pneg %p104
        $region58: #{tpu_custom_call.1} parent=47 // pred_check_branch
          %457 = sbr.rel (%p455) target = $region60
        $region59: #{tpu_custom_call.1} parent=47 // pred_region
          %s458 = sand.u32 %s32, 1
          %s459 = scalar_lea.sflag [#allocation6], %s458
          %s460 = sand.u32 %s94, 1
          %s461 = smul.addr %s460, 8
          %s462 = scalar_lea.vmem [#allocation7], %s461
          %464 = vsyncadd %s459, 0
          %s465 = smul.addr %s32, 8
          %s466 = scalar_lea.hbm %s2, %s465
          %s468 = sshll.u32 %s466, 4
          %s469 = int_to_ptr.hbm [resolvable:$true] %s468
          %s470 = sshll.u32 %s462, 4
          %s471 = int_to_ptr.vmem [resolvable:$true] %s470
          %473 = dma.hbm_to_vmem [thread:$0]  %s469, 128, %s471, %s459
        $region60: #{tpu_custom_call.1} parent=47 // pred_fallthru
          _
        // Predicated region
        $region61: #{tpu_custom_call.1} parent=47 // pred_check
          %p474 = pneg %p130
        $region62: #{tpu_custom_call.1} parent=47 // pred_check_branch
          %476 = sbr.rel (%p474) target = $region64
        $region63: #{tpu_custom_call.1} parent=47 // pred_region
          %s477 = sand.u32 %s32, 1
          %s478 = scalar_lea.sflag [#allocation9], %s477
          %s479 = sand.u32 %s120, 1
          %s480 = smul.addr %s479, 8
          %s481 = scalar_lea.vmem [#allocation8], %s480
          %483 = vsyncadd %s478, 0
          %s484 = smul.addr %s32, 8
          %s485 = scalar_lea.hbm %s3, %s484
          %s487 = sshll.u32 %s485, 4
          %s488 = int_to_ptr.hbm [resolvable:$true] %s487
          %s489 = sshll.u32 %s481, 4
          %s490 = int_to_ptr.vmem [resolvable:$true] %s489
          %492 = dma.hbm_to_vmem [thread:$0]  %s488, 128, %s490, %s478
        $region64: #{tpu_custom_call.1} parent=47 // pred_fallthru
          _
      $region48: #{tpu_custom_call.1} parent=5 // pred_fallthru
        _
      %p493 = scmp.le.s32.totalorder 1, %s32
      %p494 = scmp.lt.s32.totalorder %s32, 3
      %p495 = pnand %p493, %p494
      %p496 = pneg %p495
      // Predicated region
      $region65: #{tpu_custom_call.1} parent=5 // pred_check
        _
      $region66: #{tpu_custom_call.1} parent=5 // pred_check_branch
        %498 = sbr.rel (%p495) target = $region68
      $region67: #{tpu_custom_call.1} parent=5 // pred_region
        %s499 = ssub.s32 %s32, 1
        %s500 = sand.u32 %s45, 1
        %s501 = scalar_lea.sflag [#allocation3], %s500
        %s502 = sand.u32 %s45, 1
        %s503 = smul.addr %s502, 8
        %s504 = scalar_lea.vmem [#allocation2], %s503
        // Predicated region
        $region69: #{tpu_custom_call.1} parent=67 // pred_check
          %p505 = pneg %p58
        $region70: #{tpu_custom_call.1} parent=67 // pred_check_branch
          %507 = sbr.rel (%p505) target = $region72
        $region71: #{tpu_custom_call.1} parent=67 // pred_region
          %509 = dma.done %s501, 128
        $region72: #{tpu_custom_call.1} parent=67 // pred_fallthru
          _
        %s510 = sand.u32 %s37, 1
        %s511 = scalar_lea.sflag [#allocation6], %s510
        %s512 = sand.u32 %s71, 1
        %s513 = smul.addr %s512, 8
        %s514 = scalar_lea.vmem [#allocation5], %s513
        // Predicated region
        $region73: #{tpu_custom_call.1} parent=67 // pred_check
          %p515 = pneg %p84
        $region74: #{tpu_custom_call.1} parent=67 // pred_check_branch
          %517 = sbr.rel (%p515) target = $region76
        $region75: #{tpu_custom_call.1} parent=67 // pred_region
          %519 = dma.done %s511, 128
        $region76: #{tpu_custom_call.1} parent=67 // pred_fallthru
          _
        %s520 = sand.u32 %s37, 1
        %s521 = scalar_lea.sflag [#allocation6], %s520
        %s522 = sand.u32 %s97, 1
        %s523 = smul.addr %s522, 8
        %s524 = scalar_lea.vmem [#allocation7], %s523
        // Predicated region
        $region77: #{tpu_custom_call.1} parent=67 // pred_check
          %p525 = pneg %p110
        $region78: #{tpu_custom_call.1} parent=67 // pred_check_branch
          %527 = sbr.rel (%p525) target = $region80
        $region79: #{tpu_custom_call.1} parent=67 // pred_region
          %529 = dma.done %s521, 128
        $region80: #{tpu_custom_call.1} parent=67 // pred_fallthru
          _
        %s530 = sand.u32 %s37, 1
        %s531 = scalar_lea.sflag [#allocation9], %s530
        %s532 = sand.u32 %s123, 1
        %s533 = smul.addr %s532, 8
        %s534 = scalar_lea.vmem [#allocation8], %s533
        // Predicated region
        $region81: #{tpu_custom_call.1} parent=67 // pred_check
          %p535 = pneg %p136
        $region82: #{tpu_custom_call.1} parent=67 // pred_check_branch
          %537 = sbr.rel (%p535) target = $region84
        $region83: #{tpu_custom_call.1} parent=67 // pred_region
          %539 = dma.done %s531, 128
        $region84: #{tpu_custom_call.1} parent=67 // pred_fallthru
          _
        // Predicated region
        $region85: #{tpu_custom_call.1} parent=67 // pred_check
          %p540 = pneg %p157
        $region86: #{tpu_custom_call.1} parent=67 // pred_check_branch
          %542 = sbr.rel (%p540) target = $region88
        $region87: #{tpu_custom_call.1} parent=67 // pred_region
          %544 = dma.done [#allocation9], 512
        $region88: #{tpu_custom_call.1} parent=67 // pred_fallthru
          _
        // Predicated region
        $region89: #{tpu_custom_call.1} parent=67 // pred_check
          %p545 = pneg %p178
        $region90: #{tpu_custom_call.1} parent=67 // pred_check_branch
          %547 = sbr.rel (%p545) target = $region92
        $region91: #{tpu_custom_call.1} parent=67 // pred_region
          %549 = dma.done [#allocation12], 512
        $region92: #{tpu_custom_call.1} parent=67 // pred_fallthru
          _
        // Predicated region
        $region93: #{tpu_custom_call.1} parent=67 // pred_check
          %p550 = pneg %p199
        $region94: #{tpu_custom_call.1} parent=67 // pred_check_branch
          %552 = sbr.rel (%p550) target = $region96
        $region95: #{tpu_custom_call.1} parent=67 // pred_region
          %554 = dma.done [#allocation12], 512
        $region96: #{tpu_custom_call.1} parent=67 // pred_fallthru
          _
        // Predicated region
        $region97: #{tpu_custom_call.1} parent=67 // pred_check
          %p555 = pneg %p220
        $region98: #{tpu_custom_call.1} parent=67 // pred_check_branch
          %557 = sbr.rel (%p555) target = $region100
        $region99: #{tpu_custom_call.1} parent=67 // pred_region
          %559 = dma.done [#allocation15], 512
        $region100: #{tpu_custom_call.1} parent=67 // pred_fallthru
          _
        %s560 = sand.u32 %s45, 1
        %s561 = scalar_lea.sflag [#allocation3], %s560
        %s562 = sand.u32 %s45, 1
        %s563 = smul.addr %s562, 8
        %s564 = scalar_lea.vmem [#allocation2], %s563
        %p565 = pneg %p58
        %p566 = pneg %p55
        %s567 = sand.u32 %s37, 1
        %s568 = scalar_lea.sflag [#allocation6], %s567
        %s569 = sand.u32 %s71, 1
        %s570 = smul.addr %s569, 8
        %s571 = scalar_lea.vmem [#allocation5], %s570
        %p572 = pneg %p84
        %p573 = pneg %p81
        %s574 = sand.u32 %s37, 1
        %s575 = scalar_lea.sflag [#allocation6], %s574
        %s576 = sand.u32 %s97, 1
        %s577 = smul.addr %s576, 8
        %s578 = scalar_lea.vmem [#allocation7], %s577
        %p579 = pneg %p110
        %p580 = pneg %p107
        %s581 = sand.u32 %s37, 1
        %s582 = scalar_lea.sflag [#allocation9], %s581
        %s583 = sand.u32 %s123, 1
        %s584 = smul.addr %s583, 8
        %s585 = scalar_lea.vmem [#allocation8], %s584
        %p586 = pneg %p136
        %p587 = pneg %p133
        %p588 = pneg %p157
        %p589 = pneg %p154
        %p590 = pneg %p178
        %p591 = pneg %p175
        %p592 = pneg %p199
        %p593 = pneg %p196
        %p594 = pneg %p220
        %p595 = pneg %p217
        %p596 = pneg %p241
        %p597 = pneg %p238
        %p598 = pneg %p262
        %p599 = pneg %p259
        %p600 = pneg %p283
        %p601 = pneg %p280
        %p602 = pneg %p304
        %p603 = pneg %p301
        %p604 = pneg %p330
        %p605 = pneg %p327
        %s606 = sand.u32 %s317, 1
        %s607 = scalar_lea.sflag [#allocation4], %s606
        %s608 = sand.u32 %s317, 1
        %s609 = smul.addr %s608, 8
        %s610 = scalar_lea.vmem [#allocation16], %s609
        %v611 = vld [vmem:[%s504] sm:$0xff]
        %v612 = vld [vmem:[%s514] sm:$0xff]
        %v613 = vld [vmem:[%s524] sm:$0xff]
        %v614 = vld [vmem:[%s534] sm:$0xff]
        %v615 = vld [vmem:[#allocation10] sm:$0xff]
        %v616 = vld [vmem:[#allocation10 + $0x8] sm:$0xff]
        %v617 = vld [vmem:[#allocation10 + $0x10] sm:$0xff]
        %v618 = vld [vmem:[#allocation10 + $0x18] sm:$0xff]
        %v619 = vld [vmem:[%s8] sm:$0x1]
        %v621 = vperm.slane %v619, 0
        %vm623 = vcmask 261120
        %v625 = vsel %vm623, %v611, 0
        %627 = vmatpush.msra.mxu0 0.0
        %628 = vmatpush.msra.mxu0 0.0
        %629 = vmatpush.msra.mxu0 0.0
        %630 = vmatpush.msra.mxu0 0.0
        %631 = vmatpush.msra.mxu0 0.0
        %632 = vmatpush.msra.mxu0 0.0
        %633 = vmatpush.msra.mxu0 0.0
        %634 = vmatpush.msra.mxu0 0.0
        %635 = vmatpush.msra.mxu0 0.0
        %636 = vmatpush.msra.mxu0 0.0
        %637 = vmatpush.msra.mxu0 0.0
        %638 = vmatpush.msra.mxu0 0.0
        %639 = vmatpush.msra.mxu0 %v618
        %640 = vmatpush.msra.mxu0 %v617
        %641 = vmatpush.msra.mxu0 %v616
        %642 = vmatpush.msra.mxu0 %v615
        %643 = vmatmul.f32.gmra.mxu0 %v625
        %v644 = vpop.f32.mrf.mxu0
        %v645 = vadd.f32 %v621, %v644
        %646 = vdwg.mxu0
        %v647 = vld [vmem:[#allocation11] sm:$0xff]
        %v648 = vld [vmem:[#allocation11 + $0x8] sm:$0xff]
        %v649 = vld [vmem:[#allocation11 + $0x10] sm:$0xff]
        %v650 = vld [vmem:[#allocation11 + $0x18] sm:$0xff]
        %v651 = vld [vmem:[%s9] sm:$0x1]
        %v653 = vperm.slane %v651, 0
        %v656 = vsel %vm623, %v612, 0
        %658 = vmatpush.msra.mxu0 0.0
        %659 = vmatpush.msra.mxu0 0.0
        %660 = vmatpush.msra.mxu0 0.0
        %661 = vmatpush.msra.mxu0 0.0
        %662 = vmatpush.msra.mxu0 0.0
        %663 = vmatpush.msra.mxu0 0.0
        %664 = vmatpush.msra.mxu0 0.0
        %665 = vmatpush.msra.mxu0 0.0
        %666 = vmatpush.msra.mxu0 0.0
        %667 = vmatpush.msra.mxu0 0.0
        %668 = vmatpush.msra.mxu0 0.0
        %669 = vmatpush.msra.mxu0 0.0
        %670 = vmatpush.msra.mxu0 %v650
        %671 = vmatpush.msra.mxu0 %v649
        %672 = vmatpush.msra.mxu0 %v648
        %673 = vmatpush.msra.mxu0 %v647
        %674 = vmatmul.f32.gmra.mxu0 %v656
        %v675 = vpop.f32.mrf.mxu0
        %v676 = vadd.f32 %v653, %v675
        %677 = vdwg.mxu0
        %v678 = vld [vmem:[#allocation13] sm:$0xff]
        %v679 = vld [vmem:[#allocation13 + $0x8] sm:$0xff]
        %v680 = vld [vmem:[#allocation13 + $0x10] sm:$0xff]
        %v681 = vld [vmem:[#allocation13 + $0x18] sm:$0xff]
        %v682 = vld [vmem:[%s10] sm:$0x1]
        %v684 = vperm.slane %v682, 0
        %v687 = vsel %vm623, %v613, 0
        %689 = vmatpush.msra.mxu0 0.0
        %690 = vmatpush.msra.mxu0 0.0
        %691 = vmatpush.msra.mxu0 0.0
        %692 = vmatpush.msra.mxu0 0.0
        %693 = vmatpush.msra.mxu0 0.0
        %694 = vmatpush.msra.mxu0 0.0
        %695 = vmatpush.msra.mxu0 0.0
        %696 = vmatpush.msra.mxu0 0.0
        %697 = vmatpush.msra.mxu0 0.0
        %698 = vmatpush.msra.mxu0 0.0
        %699 = vmatpush.msra.mxu0 0.0
        %700 = vmatpush.msra.mxu0 0.0
        %701 = vmatpush.msra.mxu0 %v681
        %702 = vmatpush.msra.mxu0 %v680
        %703 = vmatpush.msra.mxu0 %v679
        %704 = vmatpush.msra.mxu0 %v678
        %705 = vmatmul.f32.gmra.mxu0 %v687
        %v706 = vpop.f32.mrf.mxu0
        %v707 = vadd.f32 %v684, %v706
        %708 = vdwg.mxu0
        %710 = vrot.lane.b32.xlu0 %v645, 120
        %v711 = vpop.permute.xlu0 %710
        %713 = vrot.lane.b32.xlu0 %v645, 112
        %v714 = vpop.permute.xlu0 %713
        %716 = vrot.lane.b32.xlu0 %v645, 104
        %v717 = vpop.permute.xlu0 %716
        %v719 = vrot.slane %v714, 4
        %vm720 = vcmask 1047556
        %v721 = vsel %vm720, %v719, %v645
        %v722 = vrot.slane %v645, 4
        %v723 = vsel %vm720, %v714, %v722
        %v725 = vunpack.c.l.s4 1983009808
        %v726 = vunpack.c.0.s8 %v725
        %v727 = vperm.slane %v721, %v726
        %v729 = vunpack.c.l.s4 1983009808
        %v730 = vunpack.c.0.s8 %v729
        %v731 = vperm.slane %v723, %v730
        %v732 = vrot.slane %v717, 4
        %v733 = vsel %vm720, %v732, %v711
        %v734 = vrot.slane %v711, 4
        %v735 = vsel %vm720, %v717, %v734
        %v737 = vunpack.c.l.s4 1983009808
        %v738 = vunpack.c.0.s8 %v737
        %v739 = vperm.slane %v733, %v738
        %v741 = vunpack.c.l.s4 1983009808
        %v742 = vunpack.c.0.s8 %v741
        %v743 = vperm.slane %v735, %v742
        %v744 = vrot.slane %v739, 4
        %v745 = vsel %vm720, %v744, %v727
        %v746 = vrot.slane %v727, 4
        %v747 = vsel %vm720, %v739, %v746
        %v749 = vunpack.c.l.s4 1934713408
        %v750 = vunpack.c.0.s8 %v749
        %v751 = vperm.slane %v745, %v750
        %v753 = vunpack.c.l.s4 1934713408
        %v754 = vunpack.c.0.s8 %v753
        %v755 = vperm.slane %v747, %v754
        %v756 = vrot.slane %v743, 4
        %v757 = vsel %vm720, %v756, %v731
        %v758 = vrot.slane %v731, 4
        %v759 = vsel %vm720, %v743, %v758
        %v761 = vunpack.c.l.s4 1934713408
        %v762 = vunpack.c.0.s8 %v761
        %v763 = vperm.slane %v757, %v762
        %v765 = vunpack.c.l.s4 1934713408
        %v766 = vunpack.c.0.s8 %v765
        %v767 = vperm.slane %v759, %v766
        %v768 = vrot.slane %v751, 4
        %v769 = vsel %vm720, 0.0, %v768
        %v770 = vrot.slane %v755, 4
        %v771 = vsel %vm720, 0.0, %v770
        %v772 = vrot.slane %v763, 4
        %v773 = vsel %vm720, 0.0, %v772
        %v774 = vrot.slane %v767, 4
        %v775 = vsel %vm720, 0.0, %v774
        %v776 = vsel %vm720, %v770, %v751
        %v778 = vunpack.c.l.s4 1983009808
        %v779 = vunpack.c.0.s8 %v778
        %v780 = vperm.slane %v776, %v779
        %v781 = vrot.slane %v771, 4
        %v782 = vsel %vm720, %v781, %v769
        %v784 = vunpack.c.l.s4 1983009808
        %v785 = vunpack.c.0.s8 %v784
        %v786 = vperm.slane %v782, %v785
        %v787 = vsel %vm720, %v774, %v763
        %v789 = vunpack.c.l.s4 1983009808
        %v790 = vunpack.c.0.s8 %v789
        %v791 = vperm.slane %v787, %v790
        %v792 = vrot.slane %v775, 4
        %v793 = vsel %vm720, %v792, %v773
        %v795 = vunpack.c.l.s4 1983009808
        %v796 = vunpack.c.0.s8 %v795
        %v797 = vperm.slane %v793, %v796
        %v798 = vrot.slane %v786, 4
        %v799 = vsel %vm720, %v798, %v780
        %v800 = vrot.slane %v780, 4
        %v801 = vsel %vm720, %v786, %v800
        %v803 = vunpack.c.l.s4 1934713408
        %v804 = vunpack.c.0.s8 %v803
        %v805 = vperm.slane %v799, %v804
        %v807 = vunpack.c.l.s4 1934713408
        %v808 = vunpack.c.0.s8 %v807
        %v809 = vperm.slane %v801, %v808
        %v810 = vrot.slane %v797, 4
        %v811 = vsel %vm720, %v810, %v791
        %v812 = vrot.slane %v791, 4
        %v813 = vsel %vm720, %v797, %v812
        %v815 = vunpack.c.l.s4 1934713408
        %v816 = vunpack.c.0.s8 %v815
        %v817 = vperm.slane %v811, %v816
        %v819 = vunpack.c.l.s4 1934713408
        %v820 = vunpack.c.0.s8 %v819
        %v821 = vperm.slane %v813, %v820
        %v822 = vrot.slane %v817, 4
        %v823 = vsel %vm720, %v822, %v805
        %v824 = vrot.slane %v805, 4
        %v825 = vsel %vm720, %v817, %v824
        %v826 = vrot.slane %v821, 4
        %v827 = vsel %vm720, %v826, %v809
        %v828 = vrot.slane %v809, 4
        %v829 = vsel %vm720, %v821, %v828
        %831 = vrot.lane.b32.xlu0 %v676, 120
        %v832 = vpop.permute.xlu0 %831
        %834 = vrot.lane.b32.xlu0 %v676, 112
        %v835 = vpop.permute.xlu0 %834
        %837 = vrot.lane.b32.xlu0 %v676, 104
        %v838 = vpop.permute.xlu0 %837
        %v840 = vrot.slane %v835, 4
        %v841 = vsel %vm720, %v840, %v676
        %v842 = vrot.slane %v676, 4
        %v843 = vsel %vm720, %v835, %v842
        %v845 = vunpack.c.l.s4 1983009808
        %v846 = vunpack.c.0.s8 %v845
        %v847 = vperm.slane %v841, %v846
        %v849 = vunpack.c.l.s4 1983009808
        %v850 = vunpack.c.0.s8 %v849
        %v851 = vperm.slane %v843, %v850
        %v852 = vrot.slane %v838, 4
        %v853 = vsel %vm720, %v852, %v832
        %v854 = vrot.slane %v832, 4
        %v855 = vsel %vm720, %v838, %v854
        %v857 = vunpack.c.l.s4 1983009808
        %v858 = vunpack.c.0.s8 %v857
        %v859 = vperm.slane %v853, %v858
        %v861 = vunpack.c.l.s4 1983009808
        %v862 = vunpack.c.0.s8 %v861
        %v863 = vperm.slane %v855, %v862
        %v864 = vrot.slane %v859, 4
        %v865 = vsel %vm720, %v864, %v847
        %v866 = vrot.slane %v847, 4
        %v867 = vsel %vm720, %v859, %v866
        %v869 = vunpack.c.l.s4 1934713408
        %v870 = vunpack.c.0.s8 %v869
        %v871 = vperm.slane %v865, %v870
        %v873 = vunpack.c.l.s4 1934713408
        %v874 = vunpack.c.0.s8 %v873
        %v875 = vperm.slane %v867, %v874
        %v876 = vrot.slane %v863, 4
        %v877 = vsel %vm720, %v876, %v851
        %v878 = vrot.slane %v851, 4
        %v879 = vsel %vm720, %v863, %v878
        %v881 = vunpack.c.l.s4 1934713408
        %v882 = vunpack.c.0.s8 %v881
        %v883 = vperm.slane %v877, %v882
        %v885 = vunpack.c.l.s4 1934713408
        %v886 = vunpack.c.0.s8 %v885
        %v887 = vperm.slane %v879, %v886
        %v888 = vrot.slane %v871, 4
        %v889 = vsel %vm720, 0.0, %v888
        %v890 = vrot.slane %v875, 4
        %v891 = vsel %vm720, 0.0, %v890
        %v892 = vrot.slane %v883, 4
        %v893 = vsel %vm720, 0.0, %v892
        %v894 = vrot.slane %v887, 4
        %v895 = vsel %vm720, 0.0, %v894
        %v896 = vsel %vm720, %v890, %v871
        %v898 = vunpack.c.l.s4 1983009808
        %v899 = vunpack.c.0.s8 %v898
        %v900 = vperm.slane %v896, %v899
        %v901 = vrot.slane %v891, 4
        %v902 = vsel %vm720, %v901, %v889
        %v904 = vunpack.c.l.s4 1983009808
        %v905 = vunpack.c.0.s8 %v904
        %v906 = vperm.slane %v902, %v905
        %v907 = vsel %vm720, %v894, %v883
        %v909 = vunpack.c.l.s4 1983009808
        %v910 = vunpack.c.0.s8 %v909
        %v911 = vperm.slane %v907, %v910
        %v912 = vrot.slane %v895, 4
        %v913 = vsel %vm720, %v912, %v893
        %v915 = vunpack.c.l.s4 1983009808
        %v916 = vunpack.c.0.s8 %v915
        %v917 = vperm.slane %v913, %v916
        %v918 = vrot.slane %v906, 4
        %v919 = vsel %vm720, %v918, %v900
        %v920 = vrot.slane %v900, 4
        %v921 = vsel %vm720, %v906, %v920
        %v923 = vunpack.c.l.s4 1934713408
        %v924 = vunpack.c.0.s8 %v923
        %v925 = vperm.slane %v919, %v924
        %v927 = vunpack.c.l.s4 1934713408
        %v928 = vunpack.c.0.s8 %v927
        %v929 = vperm.slane %v921, %v928
        %v930 = vrot.slane %v917, 4
        %v931 = vsel %vm720, %v930, %v911
        %v932 = vrot.slane %v911, 4
        %v933 = vsel %vm720, %v917, %v932
        %v935 = vunpack.c.l.s4 1934713408
        %v936 = vunpack.c.0.s8 %v935
        %v937 = vperm.slane %v931, %v936
        %v939 = vunpack.c.l.s4 1934713408
        %v940 = vunpack.c.0.s8 %v939
        %v941 = vperm.slane %v933, %v940
        %v942 = vrot.slane %v937, 4
        %v943 = vsel %vm720, %v942, %v925
        %v944 = vrot.slane %v925, 4
        %v945 = vsel %vm720, %v937, %v944
        %v946 = vrot.slane %v941, 4
        %v947 = vsel %vm720, %v946, %v929
        %v948 = vrot.slane %v929, 4
        %v949 = vsel %vm720, %v941, %v948
        %951 = vrot.lane.b32.xlu0 %v707, 120
        %v952 = vpop.permute.xlu0 %951
        %954 = vrot.lane.b32.xlu0 %v707, 112
        %v955 = vpop.permute.xlu0 %954
        %957 = vrot.lane.b32.xlu0 %v707, 104
        %v958 = vpop.permute.xlu0 %957
        %v960 = vrot.slane %v955, 4
        %v961 = vsel %vm720, %v960, %v707
        %v962 = vrot.slane %v707, 4
        %v963 = vsel %vm720, %v955, %v962
        %v965 = vunpack.c.l.s4 1983009808
        %v966 = vunpack.c.0.s8 %v965
        %v967 = vperm.slane %v961, %v966
        %v969 = vunpack.c.l.s4 1983009808
        %v970 = vunpack.c.0.s8 %v969
        %v971 = vperm.slane %v963, %v970
        %v972 = vrot.slane %v958, 4
        %v973 = vsel %vm720, %v972, %v952
        %v974 = vrot.slane %v952, 4
        %v975 = vsel %vm720, %v958, %v974
        %v977 = vunpack.c.l.s4 1983009808
        %v978 = vunpack.c.0.s8 %v977
        %v979 = vperm.slane %v973, %v978
        %v981 = vunpack.c.l.s4 1983009808
        %v982 = vunpack.c.0.s8 %v981
        %v983 = vperm.slane %v975, %v982
        %v984 = vrot.slane %v979, 4
        %v985 = vsel %vm720, %v984, %v967
        %v986 = vrot.slane %v967, 4
        %v987 = vsel %vm720, %v979, %v986
        %v989 = vunpack.c.l.s4 1934713408
        %v990 = vunpack.c.0.s8 %v989
        %v991 = vperm.slane %v985, %v990
        %v993 = vunpack.c.l.s4 1934713408
        %v994 = vunpack.c.0.s8 %v993
        %v995 = vperm.slane %v987, %v994
        %v996 = vrot.slane %v983, 4
        %v997 = vsel %vm720, %v996, %v971
        %v998 = vrot.slane %v971, 4
        %v999 = vsel %vm720, %v983, %v998
        %v1001 = vunpack.c.l.s4 1934713408
        %v1002 = vunpack.c.0.s8 %v1001
        %v1003 = vperm.slane %v997, %v1002
        %v1005 = vunpack.c.l.s4 1934713408
        %v1006 = vunpack.c.0.s8 %v1005
        %v1007 = vperm.slane %v999, %v1006
        %v1008 = vrot.slane %v991, 4
        %v1009 = vsel %vm720, 0.0, %v1008
        %v1010 = vrot.slane %v995, 4
        %v1011 = vsel %vm720, 0.0, %v1010
        %v1012 = vrot.slane %v1003, 4
        %v1013 = vsel %vm720, 0.0, %v1012
        %v1014 = vrot.slane %v1007, 4
        %v1015 = vsel %vm720, 0.0, %v1014
        %v1016 = vsel %vm720, %v1010, %v991
        %v1018 = vunpack.c.l.s4 1983009808
        %v1019 = vunpack.c.0.s8 %v1018
        %v1020 = vperm.slane %v1016, %v1019
        %v1021 = vrot.slane %v1011, 4
        %v1022 = vsel %vm720, %v1021, %v1009
        %v1024 = vunpack.c.l.s4 1983009808
        %v1025 = vunpack.c.0.s8 %v1024
        %v1026 = vperm.slane %v1022, %v1025
        %v1027 = vsel %vm720, %v1014, %v1003
        %v1029 = vunpack.c.l.s4 1983009808
        %v1030 = vunpack.c.0.s8 %v1029
        %v1031 = vperm.slane %v1027, %v1030
        %v1032 = vrot.slane %v1015, 4
        %v1033 = vsel %vm720, %v1032, %v1013
        %v1035 = vunpack.c.l.s4 1983009808
        %v1036 = vunpack.c.0.s8 %v1035
        %v1037 = vperm.slane %v1033, %v1036
        %v1038 = vrot.slane %v1026, 4
        %v1039 = vsel %vm720, %v1038, %v1020
        %v1040 = vrot.slane %v1020, 4
        %v1041 = vsel %vm720, %v1026, %v1040
        %v1043 = vunpack.c.l.s4 1934713408
        %v1044 = vunpack.c.0.s8 %v1043
        %v1045 = vperm.slane %v1039, %v1044
        %v1047 = vunpack.c.l.s4 1934713408
        %v1048 = vunpack.c.0.s8 %v1047
        %v1049 = vperm.slane %v1041, %v1048
        %v1050 = vrot.slane %v1037, 4
        %v1051 = vsel %vm720, %v1050, %v1031
        %v1052 = vrot.slane %v1031, 4
        %v1053 = vsel %vm720, %v1037, %v1052
        %v1055 = vunpack.c.l.s4 1934713408
        %v1056 = vunpack.c.0.s8 %v1055
        %v1057 = vperm.slane %v1051, %v1056
        %v1059 = vunpack.c.l.s4 1934713408
        %v1060 = vunpack.c.0.s8 %v1059
        %v1061 = vperm.slane %v1053, %v1060
        %v1062 = vrot.slane %v1057, 4
        %v1063 = vsel %vm720, %v1062, %v1045
        %v1064 = vrot.slane %v1045, 4
        %v1065 = vsel %vm720, %v1057, %v1064
        %v1066 = vrot.slane %v1061, 4
        %v1067 = vsel %vm720, %v1066, %v1049
        %v1068 = vrot.slane %v1049, 4
        %v1069 = vsel %vm720, %v1061, %v1068
        %vm1070 = vcmask 64512
        %v1072 = vsel %vm1070, %v823, 0
        %v1075 = vsel %vm1070, %v943, 0
        %1077 = vmatpush.xpose.msra.mxu0 0.0
        %1078 = vmatpush.xpose.msra.mxu0 0.0
        %1079 = vmatpush.xpose.msra.mxu0 0.0
        %1080 = vmatpush.xpose.msra.mxu0 0.0
        %1081 = vmatpush.xpose.msra.mxu0 0.0
        %1082 = vmatpush.xpose.msra.mxu0 0.0
        %1083 = vmatpush.xpose.msra.mxu0 0.0
        %1084 = vmatpush.xpose.msra.mxu0 0.0
        %1085 = vmatpush.xpose.msra.mxu0 0.0
        %1086 = vmatpush.xpose.msra.mxu0 0.0
        %1087 = vmatpush.xpose.msra.mxu0 0.0
        %1088 = vmatpush.xpose.msra.mxu0 0.0
        %1089 = vmatpush.xpose.msra.mxu0 0.0
        %1090 = vmatpush.xpose.msra.mxu0 0.0
        %1091 = vmatpush.xpose.msra.mxu0 0.0
        %1092 = vmatpush.xpose.msra.mxu0 %v1075
        %1093 = vmatmul.f32.gmra.mxu0 %v1072
        %v1094 = vpop.f32.mrf.mxu0
        %v1095 = vadd.f32 %v614, %v1094
        %1096 = vdwg.mxu0
        %v1098 = vsel %vm1070, %v825, 0
        %v1101 = vsel %vm1070, %v945, 0
        %1103 = vmatpush.xpose.msra.mxu0 0.0
        %1104 = vmatpush.xpose.msra.mxu0 0.0
        %1105 = vmatpush.xpose.msra.mxu0 0.0
        %1106 = vmatpush.xpose.msra.mxu0 0.0
        %1107 = vmatpush.xpose.msra.mxu0 0.0
        %1108 = vmatpush.xpose.msra.mxu0 0.0
        %1109 = vmatpush.xpose.msra.mxu0 0.0
        %1110 = vmatpush.xpose.msra.mxu0 0.0
        %1111 = vmatpush.xpose.msra.mxu0 0.0
        %1112 = vmatpush.xpose.msra.mxu0 0.0
        %1113 = vmatpush.xpose.msra.mxu0 0.0
        %1114 = vmatpush.xpose.msra.mxu0 0.0
        %1115 = vmatpush.xpose.msra.mxu0 0.0
        %1116 = vmatpush.xpose.msra.mxu0 0.0
        %1117 = vmatpush.xpose.msra.mxu0 0.0
        %1118 = vmatpush.xpose.msra.mxu0 %v1101
        %1119 = vmatmul.f32.gmra.mxu0 %v1098
        %v1120 = vpop.f32.mrf.mxu0
        %v1121 = vadd.f32 %v614, %v1120
        %1122 = vdwg.mxu0
        %v1124 = vsel %vm1070, %v827, 0
        %v1127 = vsel %vm1070, %v947, 0
        %1129 = vmatpush.xpose.msra.mxu0 0.0
        %1130 = vmatpush.xpose.msra.mxu0 0.0
        %1131 = vmatpush.xpose.msra.mxu0 0.0
        %1132 = vmatpush.xpose.msra.mxu0 0.0
        %1133 = vmatpush.xpose.msra.mxu0 0.0
        %1134 = vmatpush.xpose.msra.mxu0 0.0
        %1135 = vmatpush.xpose.msra.mxu0 0.0
        %1136 = vmatpush.xpose.msra.mxu0 0.0
        %1137 = vmatpush.xpose.msra.mxu0 0.0
        %1138 = vmatpush.xpose.msra.mxu0 0.0
        %1139 = vmatpush.xpose.msra.mxu0 0.0
        %1140 = vmatpush.xpose.msra.mxu0 0.0
        %1141 = vmatpush.xpose.msra.mxu0 0.0
        %1142 = vmatpush.xpose.msra.mxu0 0.0
        %1143 = vmatpush.xpose.msra.mxu0 0.0
        %1144 = vmatpush.xpose.msra.mxu0 %v1127
        %1145 = vmatmul.f32.gmra.mxu0 %v1124
        %v1146 = vpop.f32.mrf.mxu0
        %v1147 = vadd.f32 %v614, %v1146
        %1148 = vdwg.mxu0
        %v1150 = vsel %vm1070, %v829, 0
        %v1153 = vsel %vm1070, %v949, 0
        %1155 = vmatpush.xpose.msra.mxu0 0.0
        %1156 = vmatpush.xpose.msra.mxu0 0.0
        %1157 = vmatpush.xpose.msra.mxu0 0.0
        %1158 = vmatpush.xpose.msra.mxu0 0.0
        %1159 = vmatpush.xpose.msra.mxu0 0.0
        %1160 = vmatpush.xpose.msra.mxu0 0.0
        %1161 = vmatpush.xpose.msra.mxu0 0.0
        %1162 = vmatpush.xpose.msra.mxu0 0.0
        %1163 = vmatpush.xpose.msra.mxu0 0.0
        %1164 = vmatpush.xpose.msra.mxu0 0.0
        %1165 = vmatpush.xpose.msra.mxu0 0.0
        %1166 = vmatpush.xpose.msra.mxu0 0.0
        %1167 = vmatpush.xpose.msra.mxu0 0.0
        %1168 = vmatpush.xpose.msra.mxu0 0.0
        %1169 = vmatpush.xpose.msra.mxu0 0.0
        %1170 = vmatpush.xpose.msra.mxu0 %v1153
        %1171 = vmatmul.f32.gmra.mxu0 %v1150
        %v1172 = vpop.f32.mrf.mxu0
        %v1173 = vadd.f32 %v614, %v1172
        %1174 = vdwg.mxu0
        %v1175 = vsel %vm1070, %v1095, -inf
        %1176 = vmax.xlane.f32.xlu0 %v1175
        %v1177 = vpop.xlane.xlu0 %1176
        %v1178 = vsel %vm1070, %v1121, -inf
        %1179 = vmax.xlane.f32.xlu0 %v1178
        %v1180 = vpop.xlane.xlu0 %1179
        %v1181 = vsel %vm1070, %v1147, -inf
        %1182 = vmax.xlane.f32.xlu0 %v1181
        %v1183 = vpop.xlane.xlu0 %1182
        %v1184 = vsel %vm1070, %v1173, -inf
        %1185 = vmax.xlane.f32.xlu0 %v1184
        %v1186 = vpop.xlane.xlu0 %1185
        %v1187 = vsub.f32 %v1095, %v1177
        %v1188 = vsub.f32 %v1121, %v1180
        %v1189 = vsub.f32 %v1147, %v1183
        %v1190 = vsub.f32 %v1173, %v1186
        %v1191 = vmul.f32 %v1187, 1.442695
        %v1192 = vpow.pop %v1191
        %v1193 = vmul.f32 %v1188, 1.442695
        %v1194 = vpow.pop %v1193
        %v1195 = vmul.f32 %v1189, 1.442695
        %v1196 = vpow.pop %v1195
        %v1197 = vmul.f32 %v1190, 1.442695
        %v1198 = vpow.pop %v1197
        %v1199 = vsel %vm1070, %v1192, 0.0
        %1200 = vadd.xlane.f32.xlu0 %v1199
        %v1201 = vpop.xlane.xlu0 %1200
        %v1202 = vsel %vm1070, %v1194, 0.0
        %1203 = vadd.xlane.f32.xlu0 %v1202
        %v1204 = vpop.xlane.xlu0 %1203
        %v1205 = vsel %vm1070, %v1196, 0.0
        %1206 = vadd.xlane.f32.xlu0 %v1205
        %v1207 = vpop.xlane.xlu0 %1206
        %v1208 = vsel %vm1070, %v1198, 0.0
        %1209 = vadd.xlane.f32.xlu0 %v1208
        %v1210 = vpop.xlane.xlu0 %1209
        %v1211 = vrcp.pop %v1201
        %v1212 = vmul.f32 %v1201, %v1211
        %v1213 = vsub.f32 1.0, %v1212
        %v1214 = vmul.f32 %v1211, %v1213
        %v1215 = vadd.f32 %v1211, %v1214
        %vm1216 = vweird.f32 %v1201
        %vm1217 = vweird.f32 %v1211
        %vm1218 = vmor %vm1216, %vm1217
        %v1219 = vsel %vm1218, %v1211, %v1215
        %v1220 = vand.u32 2147483647, %v1201
        %vm1221 = vcmp.eq.f32.partialorder %v1220, 8.507059e+37
        %v1222 = vand.u32 %v1201, 2147483648
        %v1223 = vor.u32 1.1754944e-38, %v1222
        %v1224 = vsel %vm1221, %v1223, %v1219
        %v1225 = vmul.f32 %v1192, %v1224
        %v1226 = vrcp.pop %v1204
        %v1227 = vmul.f32 %v1204, %v1226
        %v1228 = vsub.f32 1.0, %v1227
        %v1229 = vmul.f32 %v1226, %v1228
        %v1230 = vadd.f32 %v1226, %v1229
        %vm1231 = vweird.f32 %v1204
        %vm1232 = vweird.f32 %v1226
        %vm1233 = vmor %vm1231, %vm1232
        %v1234 = vsel %vm1233, %v1226, %v1230
        %v1235 = vand.u32 2147483647, %v1204
        %vm1236 = vcmp.eq.f32.partialorder %v1235, 8.507059e+37
        %v1237 = vand.u32 %v1204, 2147483648
        %v1238 = vor.u32 1.1754944e-38, %v1237
        %v1239 = vsel %vm1236, %v1238, %v1234
        %v1240 = vmul.f32 %v1194, %v1239
        %v1241 = vrcp.pop %v1207
        %v1242 = vmul.f32 %v1207, %v1241
        %v1243 = vsub.f32 1.0, %v1242
        %v1244 = vmul.f32 %v1241, %v1243
        %v1245 = vadd.f32 %v1241, %v1244
        %vm1246 = vweird.f32 %v1207
        %vm1247 = vweird.f32 %v1241
        %vm1248 = vmor %vm1246, %vm1247
        %v1249 = vsel %vm1248, %v1241, %v1245
        %v1250 = vand.u32 2147483647, %v1207
        %vm1251 = vcmp.eq.f32.partialorder %v1250, 8.507059e+37
        %v1252 = vand.u32 %v1207, 2147483648
        %v1253 = vor.u32 1.1754944e-38, %v1252
        %v1254 = vsel %vm1251, %v1253, %v1249
        %v1255 = vmul.f32 %v1196, %v1254
        %v1256 = vrcp.pop %v1210
        %v1257 = vmul.f32 %v1210, %v1256
        %v1258 = vsub.f32 1.0, %v1257
        %v1259 = vmul.f32 %v1256, %v1258
        %v1260 = vadd.f32 %v1256, %v1259
        %vm1261 = vweird.f32 %v1210
        %vm1262 = vweird.f32 %v1256
        %vm1263 = vmor %vm1261, %vm1262
        %v1264 = vsel %vm1263, %v1256, %v1260
        %v1265 = vand.u32 2147483647, %v1210
        %vm1266 = vcmp.eq.f32.partialorder %v1265, 8.507059e+37
        %v1267 = vand.u32 %v1210, 2147483648
        %v1268 = vor.u32 1.1754944e-38, %v1267
        %v1269 = vsel %vm1266, %v1268, %v1264
        %v1270 = vmul.f32 %v1198, %v1269
        %v1272 = vsel %vm1070, %v1225, 0
        %1274 = vmatpush.msra.mxu0 0.0
        %1275 = vmatpush.msra.mxu0 0.0
        %1276 = vmatpush.msra.mxu0 0.0
        %1277 = vmatpush.msra.mxu0 0.0
        %1278 = vmatpush.msra.mxu0 0.0
        %1279 = vmatpush.msra.mxu0 0.0
        %1280 = vmatpush.msra.mxu0 0.0
        %1281 = vmatpush.msra.mxu0 0.0
        %1282 = vmatpush.msra.mxu0 0.0
        %1283 = vmatpush.msra.mxu0 0.0
        %1284 = vmatpush.msra.mxu0 0.0
        %1285 = vmatpush.msra.mxu0 0.0
        %1286 = vmatpush.msra.mxu0 0.0
        %1287 = vmatpush.msra.mxu0 0.0
        %1288 = vmatpush.msra.mxu0 0.0
        %1289 = vmatpush.msra.mxu0 %v1063
        %1290 = vmatmul.f32.gmra.mxu0 %v1272
        %v1291 = vpop.f32.mrf.mxu0
        %v1292 = vadd.f32 0.0, %v1291
        %1293 = vdwg.mxu0
        %v1295 = vsel %vm1070, %v1240, 0
        %1297 = vmatpush.msra.mxu0 0.0
        %1298 = vmatpush.msra.mxu0 0.0
        %1299 = vmatpush.msra.mxu0 0.0
        %1300 = vmatpush.msra.mxu0 0.0
        %1301 = vmatpush.msra.mxu0 0.0
        %1302 = vmatpush.msra.mxu0 0.0
        %1303 = vmatpush.msra.mxu0 0.0
        %1304 = vmatpush.msra.mxu0 0.0
        %1305 = vmatpush.msra.mxu0 0.0
        %1306 = vmatpush.msra.mxu0 0.0
        %1307 = vmatpush.msra.mxu0 0.0
        %1308 = vmatpush.msra.mxu0 0.0
        %1309 = vmatpush.msra.mxu0 0.0
        %1310 = vmatpush.msra.mxu0 0.0
        %1311 = vmatpush.msra.mxu0 0.0
        %1312 = vmatpush.msra.mxu0 %v1065
        %1313 = vmatmul.f32.gmra.mxu0 %v1295
        %v1314 = vpop.f32.mrf.mxu0
        %v1315 = vadd.f32 0.0, %v1314
        %1316 = vdwg.mxu0
        %v1318 = vsel %vm1070, %v1255, 0
        %1320 = vmatpush.msra.mxu0 0.0
        %1321 = vmatpush.msra.mxu0 0.0
        %1322 = vmatpush.msra.mxu0 0.0
        %1323 = vmatpush.msra.mxu0 0.0
        %1324 = vmatpush.msra.mxu0 0.0
        %1325 = vmatpush.msra.mxu0 0.0
        %1326 = vmatpush.msra.mxu0 0.0
        %1327 = vmatpush.msra.mxu0 0.0
        %1328 = vmatpush.msra.mxu0 0.0
        %1329 = vmatpush.msra.mxu0 0.0
        %1330 = vmatpush.msra.mxu0 0.0
        %1331 = vmatpush.msra.mxu0 0.0
        %1332 = vmatpush.msra.mxu0 0.0
        %1333 = vmatpush.msra.mxu0 0.0
        %1334 = vmatpush.msra.mxu0 0.0
        %1335 = vmatpush.msra.mxu0 %v1067
        %1336 = vmatmul.f32.gmra.mxu0 %v1318
        %v1337 = vpop.f32.mrf.mxu0
        %v1338 = vadd.f32 0.0, %v1337
        %1339 = vdwg.mxu0
        %v1341 = vsel %vm1070, %v1270, 0
        %1343 = vmatpush.msra.mxu0 0.0
        %1344 = vmatpush.msra.mxu0 0.0
        %1345 = vmatpush.msra.mxu0 0.0
        %1346 = vmatpush.msra.mxu0 0.0
        %1347 = vmatpush.msra.mxu0 0.0
        %1348 = vmatpush.msra.mxu0 0.0
        %1349 = vmatpush.msra.mxu0 0.0
        %1350 = vmatpush.msra.mxu0 0.0
        %1351 = vmatpush.msra.mxu0 0.0
        %1352 = vmatpush.msra.mxu0 0.0
        %1353 = vmatpush.msra.mxu0 0.0
        %1354 = vmatpush.msra.mxu0 0.0
        %1355 = vmatpush.msra.mxu0 0.0
        %1356 = vmatpush.msra.mxu0 0.0
        %1357 = vmatpush.msra.mxu0 0.0
        %1358 = vmatpush.msra.mxu0 %v1069
        %1359 = vmatmul.f32.gmra.mxu0 %v1341
        %v1360 = vpop.f32.mrf.mxu0
        %v1361 = vadd.f32 0.0, %v1360
        %1362 = vdwg.mxu0
        %v1363 = vrot.slane %v1338, 4
        %v1364 = vsel %vm720, %v1363, %v1292
        %v1365 = vrot.slane %v1292, 4
        %v1366 = vsel %vm720, %v1338, %v1365
        %v1368 = vunpack.c.l.s4 1983009808
        %v1369 = vunpack.c.0.s8 %v1368
        %v1370 = vperm.slane %v1364, %v1369
        %v1372 = vunpack.c.l.s4 1983009808
        %v1373 = vunpack.c.0.s8 %v1372
        %v1374 = vperm.slane %v1366, %v1373
        %v1375 = vrot.slane %v1361, 4
        %v1376 = vsel %vm720, %v1375, %v1315
        %v1377 = vrot.slane %v1315, 4
        %v1378 = vsel %vm720, %v1361, %v1377
        %v1380 = vunpack.c.l.s4 1983009808
        %v1381 = vunpack.c.0.s8 %v1380
        %v1382 = vperm.slane %v1376, %v1381
        %v1384 = vunpack.c.l.s4 1983009808
        %v1385 = vunpack.c.0.s8 %v1384
        %v1386 = vperm.slane %v1378, %v1385
        %v1387 = vrot.slane %v1382, 4
        %v1388 = vsel %vm720, %v1387, %v1370
        %v1389 = vrot.slane %v1370, 4
        %v1390 = vsel %vm720, %v1382, %v1389
        %v1392 = vunpack.c.l.s4 1934713408
        %v1393 = vunpack.c.0.s8 %v1392
        %v1394 = vperm.slane %v1388, %v1393
        %v1396 = vunpack.c.l.s4 1934713408
        %v1397 = vunpack.c.0.s8 %v1396
        %v1398 = vperm.slane %v1390, %v1397
        %v1399 = vrot.slane %v1386, 4
        %v1400 = vsel %vm720, %v1399, %v1374
        %v1401 = vrot.slane %v1374, 4
        %v1402 = vsel %vm720, %v1386, %v1401
        %v1404 = vunpack.c.l.s4 1934713408
        %v1405 = vunpack.c.0.s8 %v1404
        %v1406 = vperm.slane %v1400, %v1405
        %v1408 = vunpack.c.l.s4 1934713408
        %v1409 = vunpack.c.0.s8 %v1408
        %v1410 = vperm.slane %v1402, %v1409
        %v1411 = vrot.slane %v1394, 4
        %v1412 = vsel %vm720, 0.0, %v1411
        %v1413 = vrot.slane %v1398, 4
        %v1414 = vsel %vm720, 0.0, %v1413
        %v1415 = vrot.slane %v1406, 4
        %v1416 = vsel %vm720, 0.0, %v1415
        %v1417 = vrot.slane %v1410, 4
        %v1418 = vsel %vm720, 0.0, %v1417
        %v1419 = vsel %vm720, %v1413, %v1394
        %v1421 = vunpack.c.l.s4 1983009808
        %v1422 = vunpack.c.0.s8 %v1421
        %v1423 = vperm.slane %v1419, %v1422
        %v1424 = vrot.slane %v1414, 4
        %v1425 = vsel %vm720, %v1424, %v1412
        %v1427 = vunpack.c.l.s4 1983009808
        %v1428 = vunpack.c.0.s8 %v1427
        %v1429 = vperm.slane %v1425, %v1428
        %v1430 = vsel %vm720, %v1417, %v1406
        %v1432 = vunpack.c.l.s4 1983009808
        %v1433 = vunpack.c.0.s8 %v1432
        %v1434 = vperm.slane %v1430, %v1433
        %v1435 = vrot.slane %v1418, 4
        %v1436 = vsel %vm720, %v1435, %v1416
        %v1438 = vunpack.c.l.s4 1983009808
        %v1439 = vunpack.c.0.s8 %v1438
        %v1440 = vperm.slane %v1436, %v1439
        %v1441 = vrot.slane %v1429, 4
        %v1442 = vsel %vm720, %v1441, %v1423
        %v1443 = vrot.slane %v1423, 4
        %v1444 = vsel %vm720, %v1429, %v1443
        %v1446 = vunpack.c.l.s4 1934713408
        %v1447 = vunpack.c.0.s8 %v1446
        %v1448 = vperm.slane %v1442, %v1447
        %v1450 = vunpack.c.l.s4 1934713408
        %v1451 = vunpack.c.0.s8 %v1450
        %v1452 = vperm.slane %v1444, %v1451
        %v1453 = vrot.slane %v1440, 4
        %v1454 = vsel %vm720, %v1453, %v1434
        %v1455 = vrot.slane %v1434, 4
        %v1456 = vsel %vm720, %v1440, %v1455
        %v1458 = vunpack.c.l.s4 1934713408
        %v1459 = vunpack.c.0.s8 %v1458
        %v1460 = vperm.slane %v1454, %v1459
        %v1462 = vunpack.c.l.s4 1934713408
        %v1463 = vunpack.c.0.s8 %v1462
        %v1464 = vperm.slane %v1456, %v1463
        %v1465 = vrot.slane %v1460, 4
        %v1466 = vsel %vm720, %v1465, %v1448
        %v1467 = vrot.slane %v1448, 4
        %v1468 = vsel %vm720, %v1460, %v1467
        %v1469 = vrot.slane %v1464, 4
        %v1470 = vsel %vm720, %v1469, %v1452
        %v1471 = vrot.slane %v1452, 4
        %v1472 = vsel %vm720, %v1464, %v1471
        %1474 = vrot.lane.b32.xlu0 %v1468, 8
        %v1475 = vpop.permute.xlu0 %1474
        %1478 = vrot.lane.b32.xlu0 %v1470, 16
        %v1479 = vpop.permute.xlu0 %1478
        %1482 = vrot.lane.b32.xlu0 %v1472, 24
        %v1483 = vpop.permute.xlu0 %1482
        %v1485 = vsel %vm1070, %v1466, %v1475
        %vm1486 = vcmask 130048
        %v1487 = vsel %vm1486, %v1485, %v1479
        %vm1488 = vcmask 195584
        %v1489 = vsel %vm1488, %v1487, %v1483
        %v1490 = vld [vmem:[#allocation14] sm:$0xff]
        %v1491 = vld [vmem:[#allocation14 + $0x8] sm:$0xff]
        %v1492 = vld [vmem:[#allocation14 + $0x10] sm:$0xff]
        %v1493 = vld [vmem:[#allocation14 + $0x18] sm:$0xff]
        %v1494 = vld [vmem:[%s11] sm:$0x1]
        %v1496 = vperm.slane %v1494, 0
        %v1499 = vsel %vm623, %v1489, 0
        %1501 = vmatpush.msra.mxu0 0.0
        %1502 = vmatpush.msra.mxu0 0.0
        %1503 = vmatpush.msra.mxu0 0.0
        %1504 = vmatpush.msra.mxu0 0.0
        %1505 = vmatpush.msra.mxu0 0.0
        %1506 = vmatpush.msra.mxu0 0.0
        %1507 = vmatpush.msra.mxu0 0.0
        %1508 = vmatpush.msra.mxu0 0.0
        %1509 = vmatpush.msra.mxu0 0.0
        %1510 = vmatpush.msra.mxu0 0.0
        %1511 = vmatpush.msra.mxu0 0.0
        %1512 = vmatpush.msra.mxu0 0.0
        %1513 = vmatpush.msra.mxu0 %v1493
        %1514 = vmatpush.msra.mxu0 %v1492
        %1515 = vmatpush.msra.mxu0 %v1491
        %1516 = vmatpush.msra.mxu0 %v1490
        %1517 = vmatmul.f32.gmra.mxu0 %v1499
        %v1518 = vpop.f32.mrf.mxu0
        %v1519 = vadd.f32 %v1496, %v1518
        %1520 = vdwg.mxu0
        %1521 = vst.msk [vmem:[%s610] sm:$0xff] %vm623, %v1519
        %s1522 = sand.u32 %s317, 1
        %s1523 = scalar_lea.sflag [#allocation4], %s1522
        %s1524 = sand.u32 %s317, 1
        %s1525 = smul.addr %s1524, 8
        %s1526 = scalar_lea.vmem [#allocation16], %s1525
        // Predicated region
        $region101: #{tpu_custom_call.1} parent=67 // pred_check
          %p1527 = pneg %p327
        $region102: #{tpu_custom_call.1} parent=67 // pred_check_branch
          %1529 = sbr.rel (%p1527) target = $region104
        $region103: #{tpu_custom_call.1} parent=67 // pred_region
          %1531 = vsyncadd %s1523, 0
          %s1532 = smul.addr %s37, 8
          %s1533 = scalar_lea.hbm %s12, %s1532
          %s1535 = sshll.u32 %s1526, 4
          %s1536 = int_to_ptr.vmem [resolvable:$true] %s1535
          %s1537 = sshll.u32 %s1533, 4
          %s1538 = int_to_ptr.hbm [resolvable:$true] %s1537
          %1540 = dma.vmem_to_hbm [thread:$0]  %s1536, 128, %s1538, %s1523
        $region104: #{tpu_custom_call.1} parent=67 // pred_fallthru
          _
      $region68: #{tpu_custom_call.1} parent=5 // pred_fallthru
        _
      %p1541 = scmp.le.s32.totalorder 2, %s32
      // Predicated region
      $region105: #{tpu_custom_call.1} parent=5 // pred_check
        %p1542 = pneg %p1541
      $region106: #{tpu_custom_call.1} parent=5 // pred_check_branch
        %1544 = sbr.rel (%p1542) target = $region108
      $region107: #{tpu_custom_call.1} parent=5 // pred_region
        %s1545 = ssub.s32 %s32, 2
        // Predicated region
        $region109: #{tpu_custom_call.1} parent=107 // pred_check
          %p1546 = pneg %p333
        $region110: #{tpu_custom_call.1} parent=107 // pred_check_branch
          %1548 = sbr.rel (%p1546) target = $region112
        $region111: #{tpu_custom_call.1} parent=107 // pred_region
          %s1549 = sand.u32 %s318, 1
          %s1550 = scalar_lea.sflag [#allocation4], %s1549
          %s1551 = sand.u32 %s318, 1
          %s1552 = smul.addr %s1551, 8
          %s1553 = scalar_lea.vmem [#allocation16], %s1552
          %1555 = dma.done %s1550, 128
        $region112: #{tpu_custom_call.1} parent=107 // pred_fallthru
          _
      $region108: #{tpu_custom_call.1} parent=5 // pred_fallthru
        _
    $region6: #{tpu_custom_call.1} parent=1 // loop_footer
      %s36 = sadd.s32 1, %s32
    $region7: #{tpu_custom_call.1} parent=1 // loop_footer_branch
      %31 = sbr.rel target = $region3
    $region8: #{tpu_custom_call.1} parent=1 // loop_exit
      _
    %1556 = vsyncpa [#allocation3], 1
    %s1557 = scalar_lea.sflag [#allocation3], 1
    %1558 = vsyncpa %s1557, 1
    %1559 = vsyncpa [#allocation6], 1
    %s1560 = scalar_lea.sflag [#allocation6], 1
    %1561 = vsyncpa %s1560, 1
    %1562 = vsyncpa [#allocation9], 1
    %s1563 = scalar_lea.sflag [#allocation9], 1
    %1564 = vsyncpa %s1563, 1
    %1565 = vsyncpa [#allocation12], 1
    %1566 = vsyncpa [#allocation15], 1
    %1567 = vsyncpa [#allocation4], 1
    %s1568 = scalar_lea.sflag [#allocation4], 1
    %1569 = vsyncpa %s1568, 1

</llo_original>
